<compile_context>
chip_gen: v7x
topology: tpu7x:2x2x1
jax: 0.10.0
libtpu: 0.0.40
codegen_flags: <defaults>
</compile_context>

<pallas_src>
import functools
import math

import jax
import jax.numpy as jnp
from jax import lax
from jax.experimental import pallas as pl
from jax.experimental.pallas import tpu as pltpu


def _mha_kernel(q_ref, k_ref, v_ref, w_ref, b_ref, o_ref, *, heads: int, d_k: int):
    f32 = jnp.float32
    cdt = q_ref.dtype                       # compute dtype (f32 or bf16), set by wrapper
    S = q_ref.shape[1]
    D = q_ref.shape[2]

    q = q_ref[0]                            # (S, D)
    k = k_ref[0]
    v = v_ref[0]

    # Packed weight slab (4*D, D): rows [0:D)=Wq^T (pre-scaled by 1/sqrt(d_k)),
    # [D:2D)=Wk^T, [2D:3D)=Wv^T, [3D:4D)=Wo^T.  Static, sublane-aligned slices.
    wqt = w_ref[0 * D:1 * D, :]
    wkt = w_ref[1 * D:2 * D, :]
    wvt = w_ref[2 * D:3 * D, :]

    # Input projections: y = x @ W^T + b, f32 accumulation on the MXU.
    # Biases stay f32; b_ref rows: 0=bq (pre-scaled), 1=bk, 2=bv, 3=bo.
    qp = (jnp.dot(q, wqt, preferred_element_type=f32) + b_ref[0]).astype(cdt)
    kp = (jnp.dot(k, wkt, preferred_element_type=f32) + b_ref[1]).astype(cdt)
    vp = (jnp.dot(v, wvt, preferred_element_type=f32) + b_ref[2]).astype(cdt)

    # Contract the last dims of both operands: q @ k^T without materializing k^T.
    nt = (((1,), (1,)), ((), ()))

    # Accumulate head contributions directly into the output projection:
    #   out = bo + sum_h softmax(qh kh^T / sqrt(d_k)) vh @ Wo^T[h*d_k:(h+1)*d_k, :]
    acc = jnp.broadcast_to(b_ref[3], (S, D)).astype(f32)
    for h in range(heads):                  # static, unrolled (heads is small)
        lo = h * d_k
        qh = qp[:, lo:lo + d_k]             # (S, d_k)
        kh = kp[:, lo:lo + d_k]
        vh = vp[:, lo:lo + d_k]

        s = lax.dot_general(qh, kh, nt, preferred_element_type=f32)    # (S, S)
        m = jnp.max(s, axis=-1, keepdims=True)
        e = jnp.exp(s - m)                                             # f32
        l = jnp.sum(e, axis=-1, keepdims=True)                         # (S, 1)
        pv = jnp.dot(e.astype(cdt), vh, preferred_element_type=f32)    # (S, d_k)
        oh = (pv * pl.reciprocal(l)).astype(cdt)                       # O(S*d_k) normalize

        woh = w_ref[3 * D + lo:3 * D + lo + d_k, :]                    # (d_k, D) Wo^T rows
        acc = acc + jnp.dot(oh, woh, preferred_element_type=f32)

    o_ref[0] = acc.astype(o_ref.dtype)


def multi_head_attention(q, k, v, params, *, heads: int, compute_dtype=None):
    """q, k, v: (B, S, D).  params: PyTorch-layout Linear weights/biases.

    compute_dtype: dtype fed to the MXU (e.g. jnp.bfloat16 on v6e/v7x).
    All accumulation and softmax statistics stay in float32.
    """
    B, S, D = q.shape
    assert D % heads == 0
    d_k = D // heads
    out_dtype = q.dtype
    cdt = out_dtype if compute_dtype is None else compute_dtype
    inv_sqrt_dk = 1.0 / math.sqrt(d_k)
    f32 = jnp.float32

    # PyTorch nn.Linear stores W as (out, in); pre-transpose to (in, out) so the
    # kernel never transposes.  Fold the 1/sqrt(d_k) scale into Wq / bq and pack
    # everything into one weight slab and one bias slab (fewer, denser DMAs).
    wqt = params["wq"].astype(f32).T * inv_sqrt_dk
    wkt = params["wk"].astype(f32).T
    wvt = params["wv"].astype(f32).T
    wot = params["wo"].astype(f32).T
    w_all = jnp.concatenate([wqt, wkt, wvt, wot], axis=0).astype(cdt)   # (4D, D)

    b_all = jnp.stack(
        [params["bq"].astype(f32) * inv_sqrt_dk,
         params["bk"].astype(f32),
         params["bv"].astype(f32),
         params["bo"].astype(f32)], axis=0)                              # (4, D), f32

    qc = q.astype(cdt)
    kc = k.astype(cdt)
    vc = v.astype(cdt)

    seq_spec = pl.BlockSpec((1, S, D), lambda b: (b, 0, 0))
    w_spec = pl.BlockSpec((4 * D, D), lambda b: (0, 0))
    b_spec = pl.BlockSpec((4, D), lambda b: (0, 0))

    kernel = functools.partial(_mha_kernel, heads=heads, d_k=d_k)

    return pl.pallas_call(
        kernel,
        out_shape=jax.ShapeDtypeStruct((B, S, D), out_dtype),
        grid_spec=pltpu.PrefetchScalarGridSpec(
            num_scalar_prefetch=0,
            grid=(B,),
            in_specs=[seq_spec, seq_spec, seq_spec, w_spec, b_spec],
            out_specs=seq_spec,
        ),
        compiler_params=pltpu.CompilerParams(
            dimension_semantics=("parallel",)),
    )(qc, kc, vc, w_all, b_all)


def _reference_mha(q, k, v, params, *, heads: int):
    """Pure-JAX reference mirroring the PyTorch forward (eval mode, mask=None)."""
    B, S, D = q.shape
    d_k = D // heads

    def lin(x, w, b):
        return x @ w.T + b

    qp = lin(q, params["wq"], params["bq"]).reshape(B, S, heads, d_k).transpose(0, 2, 1, 3)
    kp = lin(k, params["wk"], params["bk"]).reshape(B, S, heads, d_k).transpose(0, 2, 1, 3)
    vp = lin(v, params["wv"], params["bv"]).reshape(B, S, heads, d_k).transpose(0, 2, 1, 3)

    scores = jnp.einsum("bhqd,bhkd->bhqk", qp, kp) / math.sqrt(d_k)
    scores = jax.nn.softmax(scores, axis=-1)
    out = jnp.einsum("bhqk,bhkd->bhqd", scores, vp)
    concat = out.transpose(0, 2, 1, 3).reshape(B, S, D)
    return lin(concat, params["wo"], params["bo"])


if __name__ == "__main__":
    B, S, D, H = 2, 8, 32, 4

    key = jax.random.PRNGKey(0)
    keys = jax.random.split(key, 11)

    # Deterministic synthetic parameters (PyTorch Linear shapes: W (out,in), b (out,)).
    scale = 1.0 / math.sqrt(D)
    params = {
        "wq": jax.random.uniform(keys[0], (D, D), jnp.float32, -scale, scale),
        "bq": jax.random.uniform(keys[1], (D,), jnp.float32, -scale, scale),
        "wk": jax.random.uniform(keys[2], (D, D), jnp.float32, -scale, scale),
        "bk": jax.random.uniform(keys[3], (D,), jnp.float32, -scale, scale),
        "wv": jax.random.uniform(keys[4], (D, D), jnp.float32, -scale, scale),
        "bv": jax.random.uniform(keys[5], (D,), jnp.float32, -scale, scale),
        "wo": jax.random.uniform(keys[6], (D, D), jnp.float32, -scale, scale),
        "bo": jax.random.uniform(keys[7], (D,), jnp.float32, -scale, scale),
    }

    q = jax.random.normal(keys[8], (B, S, D), jnp.float32)
    k = jax.random.normal(keys[9], (B, S, D), jnp.float32)
    v = jax.random.normal(keys[10], (B, S, D), jnp.float32)

    ref = _reference_mha(q, k, v, params, heads=H)

    # f32 compute path (default; v5e-friendly) — strict check vs. reference.
    out = multi_head_attention(q, k, v, params, heads=H)
    out = jax.block_until_ready(out)
    assert out.shape == (B, S, D)
    assert jnp.allclose(out, ref, atol=1e-4, rtol=1e-4), "f32 mismatch vs JAX reference"

    # bf16 MXU-input path (v6e/v7x) — f32 accumulation / f32 softmax stats.
    out_bf16 = multi_head_attention(q, k, v, params, heads=H,
                                    compute_dtype=jnp.bfloat16)
    out_bf16 = jax.block_until_ready(out_bf16)
    assert out_bf16.shape == (B, S, D)
    assert float(jnp.max(jnp.abs(out_bf16 - ref))) < 0.1, "bf16 path diverged"

    print("KERNEL_OK")
</pallas_src>

<mosaic_0001>
module attributes {stable_mosaic.version = 11 : i64} {
  func.func @_mha_kernel(%arg0: i32, %arg1: memref<1x8x32xf32, #tpu.memory_space<vmem>>, %arg2: memref<1x8x32xf32, #tpu.memory_space<vmem>>, %arg3: memref<1x8x32xf32, #tpu.memory_space<vmem>>, %arg4: memref<128x32xf32, #tpu.memory_space<vmem>>, %arg5: memref<4x32xf32, #tpu.memory_space<vmem>>, %arg6: memref<1x8x32xf32, #tpu.memory_space<vmem>>) attributes {dimension_semantics = [#tpu.dimension_semantics<parallel>], iteration_bounds = array<i64: 2>, scalar_prefetch = 0 : i64, scratch_operands = 0 : i64, tpu.core_type = #tpu.core_type<tc>, window_params = [{transform_indices = @transform_0, window_bounds = array<i64: 1, 8, 32>}, {transform_indices = @transform_1, window_bounds = array<i64: 1, 8, 32>}, {transform_indices = @transform_2, window_bounds = array<i64: 1, 8, 32>}, {pipeline_mode = #tpu.pipeline_mode<synchronous>, transform_indices = @transform_3, window_bounds = array<i64: 128, 32>}, {pipeline_mode = #tpu.pipeline_mode<synchronous>, transform_indices = @transform_4, window_bounds = array<i64: 4, 32>}, {transform_indices = @transform_5, window_bounds = array<i64: 1, 8, 32>}]} {
    %c0 = arith.constant 0 : index
    %c0_0 = arith.constant 0 : index
    %c0_1 = arith.constant 0 : index
    %0 = vector.load %arg1[%c0, %c0_0, %c0_1] : memref<1x8x32xf32, #tpu.memory_space<vmem>>, vector<1x8x32xf32>
    %1 = vector.shape_cast %0 : vector<1x8x32xf32> to vector<8x32xf32>
    %c0_2 = arith.constant 0 : index
    %c0_3 = arith.constant 0 : index
    %c0_4 = arith.constant 0 : index
    %2 = vector.load %arg2[%c0_2, %c0_3, %c0_4] : memref<1x8x32xf32, #tpu.memory_space<vmem>>, vector<1x8x32xf32>
    %3 = vector.shape_cast %2 : vector<1x8x32xf32> to vector<8x32xf32>
    %c0_5 = arith.constant 0 : index
    %c0_6 = arith.constant 0 : index
    %c0_7 = arith.constant 0 : index
    %4 = vector.load %arg3[%c0_5, %c0_6, %c0_7] : memref<1x8x32xf32, #tpu.memory_space<vmem>>, vector<1x8x32xf32>
    %5 = vector.shape_cast %4 : vector<1x8x32xf32> to vector<8x32xf32>
    %c0_8 = arith.constant 0 : index
    %c0_9 = arith.constant 0 : index
    %6 = vector.load %arg4[%c0_8, %c0_9] : memref<128x32xf32, #tpu.memory_space<vmem>>, vector<32x32xf32>
    %c32 = arith.constant 32 : index
    %c0_10 = arith.constant 0 : index
    %7 = vector.load %arg4[%c32, %c0_10] : memref<128x32xf32, #tpu.memory_space<vmem>>, vector<32x32xf32>
    %c64 = arith.constant 64 : index
    %c0_11 = arith.constant 0 : index
    %8 = vector.load %arg4[%c64, %c0_11] : memref<128x32xf32, #tpu.memory_space<vmem>>, vector<32x32xf32>
    %cst = arith.constant dense<0.000000e+00> : vector<8x32xf32>
    %9 = tpu.matmul %1, %6, %cst {dimension_numbers = #tpu.dot_dimension_numbers<[1], [0], [0], [1], [0, 0, 1, 1], [], []>} : vector<8x32xf32>, vector<32x32xf32>, vector<8x32xf32> -> vector<8x32xf32>
    %c0_12 = arith.constant 0 : index
    %c0_13 = arith.constant 0 : index
    %10 = vector.load %arg5[%c0_12, %c0_13] : memref<4x32xf32, #tpu.memory_space<vmem>>, vector<1x32xf32>
    %11 = vector.shape_cast %10 : vector<1x32xf32> to vector<32xf32>
    %12 = vector.shape_cast %11 : vector<32xf32> to vector<1x32xf32>
    %13 = vector.broadcast %12 : vector<1x32xf32> to vector<8x32xf32>
    %14 = arith.addf %9, %13 : vector<8x32xf32>
    %cst_14 = arith.constant dense<0.000000e+00> : vector<8x32xf32>
    %15 = tpu.matmul %3, %7, %cst_14 {dimension_numbers = #tpu.dot_dimension_numbers<[1], [0], [0], [1], [0, 0, 1, 1], [], []>} : vector<8x32xf32>, vector<32x32xf32>, vector<8x32xf32> -> vector<8x32xf32>
    %c1 = arith.constant 1 : index
    %c0_15 = arith.constant 0 : index
    %16 = vector.load %arg5[%c1, %c0_15] : memref<4x32xf32, #tpu.memory_space<vmem>>, vector<1x32xf32>
    %17 = vector.shape_cast %16 : vector<1x32xf32> to vector<32xf32>
    %18 = vector.shape_cast %17 : vector<32xf32> to vector<1x32xf32>
    %19 = vector.broadcast %18 : vector<1x32xf32> to vector<8x32xf32>
    %20 = arith.addf %15, %19 : vector<8x32xf32>
    %cst_16 = arith.constant dense<0.000000e+00> : vector<8x32xf32>
    %21 = tpu.matmul %5, %8, %cst_16 {dimension_numbers = #tpu.dot_dimension_numbers<[1], [0], [0], [1], [0, 0, 1, 1], [], []>} : vector<8x32xf32>, vector<32x32xf32>, vector<8x32xf32> -> vector<8x32xf32>
    %c2 = arith.constant 2 : index
    %c0_17 = arith.constant 0 : index
    %22 = vector.load %arg5[%c2, %c0_17] : memref<4x32xf32, #tpu.memory_space<vmem>>, vector<1x32xf32>
    %23 = vector.shape_cast %22 : vector<1x32xf32> to vector<32xf32>
    %24 = vector.shape_cast %23 : vector<32xf32> to vector<1x32xf32>
    %25 = vector.broadcast %24 : vector<1x32xf32> to vector<8x32xf32>
    %26 = arith.addf %21, %25 : vector<8x32xf32>
    %c3 = arith.constant 3 : index
    %c0_18 = arith.constant 0 : index
    %27 = vector.load %arg5[%c3, %c0_18] : memref<4x32xf32, #tpu.memory_space<vmem>>, vector<1x32xf32>
    %28 = vector.shape_cast %27 : vector<1x32xf32> to vector<32xf32>
    %29 = vector.shape_cast %28 : vector<32xf32> to vector<1x32xf32>
    %30 = vector.broadcast %29 : vector<1x32xf32> to vector<8x32xf32>
    %31 = vector.extract_strided_slice %14 {offsets = [0, 0], sizes = [8, 8], strides = [1, 1]} : vector<8x32xf32> to vector<8x8xf32>
    %32 = vector.extract_strided_slice %20 {offsets = [0, 0], sizes = [8, 8], strides = [1, 1]} : vector<8x32xf32> to vector<8x8xf32>
    %33 = vector.extract_strided_slice %26 {offsets = [0, 0], sizes = [8, 8], strides = [1, 1]} : vector<8x32xf32> to vector<8x8xf32>
    %cst_19 = arith.constant dense<0.000000e+00> : vector<8x8xf32>
    %34 = tpu.matmul %31, %32, %cst_19 {dimension_numbers = #tpu.dot_dimension_numbers<[1], [1], [0], [0], [0, 0, 1, 0], [], []>} : vector<8x8xf32>, vector<8x8xf32>, vector<8x8xf32> -> vector<8x8xf32>
    %cst_20 = arith.constant dense<0xFF800000> : vector<8xf32>
    %35 = vector.multi_reduction <maximumf>, %34, %cst_20 [1] : vector<8x8xf32> to vector<8xf32>
    %36 = vector.shape_cast %35 : vector<8xf32> to vector<8x1xf32>
    %37 = vector.broadcast %36 : vector<8x1xf32> to vector<8x8xf32>
    %38 = arith.subf %34, %37 : vector<8x8xf32>
    %39 = math.exp %38 : vector<8x8xf32>
    %cst_21 = arith.constant dense<0.000000e+00> : vector<8xf32>
    %40 = vector.multi_reduction <add>, %39, %cst_21 [1] : vector<8x8xf32> to vector<8xf32>
    %41 = vector.shape_cast %40 : vector<8xf32> to vector<8x1xf32>
    %cst_22 = arith.constant dense<0.000000e+00> : vector<8x8xf32>
    %42 = tpu.matmul %39, %33, %cst_22 {dimension_numbers = #tpu.dot_dimension_numbers<[1], [0], [0], [1], [0, 0, 1, 1], [], []>} : vector<8x8xf32>, vector<8x8xf32>, vector<8x8xf32> -> vector<8x8xf32>
    %43 = tpu.reciprocal %41 : vector<8x1xf32> -> vector<8x1xf32>
    %44 = vector.broadcast %43 : vector<8x1xf32> to vector<8x8xf32>
    %45 = arith.mulf %42, %44 : vector<8x8xf32>
    %c96 = arith.constant 96 : index
    %c0_23 = arith.constant 0 : index
    %46 = vector.load %arg4[%c96, %c0_23] : memref<128x32xf32, #tpu.memory_space<vmem>>, vector<8x32xf32>
    %cst_24 = arith.constant dense<0.000000e+00> : vector<8x32xf32>
    %47 = tpu.matmul %45, %46, %cst_24 {dimension_numbers = #tpu.dot_dimension_numbers<[1], [0], [0], [1], [0, 0, 1, 1], [], []>} : vector<8x8xf32>, vector<8x32xf32>, vector<8x32xf32> -> vector<8x32xf32>
    %48 = arith.addf %30, %47 : vector<8x32xf32>
    %49 = vector.extract_strided_slice %14 {offsets = [0, 8], sizes = [8, 8], strides = [1, 1]} : vector<8x32xf32> to vector<8x8xf32>
    %50 = vector.extract_strided_slice %20 {offsets = [0, 8], sizes = [8, 8], strides = [1, 1]} : vector<8x32xf32> to vector<8x8xf32>
    %51 = vector.extract_strided_slice %26 {offsets = [0, 8], sizes = [8, 8], strides = [1, 1]} : vector<8x32xf32> to vector<8x8xf32>
    %cst_25 = arith.constant dense<0.000000e+00> : vector<8x8xf32>
    %52 = tpu.matmul %49, %50, %cst_25 {dimension_numbers = #tpu.dot_dimension_numbers<[1], [1], [0], [0], [0, 0, 1, 0], [], []>} : vector<8x8xf32>, vector<8x8xf32>, vector<8x8xf32> -> vector<8x8xf32>
    %cst_26 = arith.constant dense<0xFF800000> : vector<8xf32>
    %53 = vector.multi_reduction <maximumf>, %52, %cst_26 [1] : vector<8x8xf32> to vector<8xf32>
    %54 = vector.shape_cast %53 : vector<8xf32> to vector<8x1xf32>
    %55 = vector.broadcast %54 : vector<8x1xf32> to vector<8x8xf32>
    %56 = arith.subf %52, %55 : vector<8x8xf32>
    %57 = math.exp %56 : vector<8x8xf32>
    %cst_27 = arith.constant dense<0.000000e+00> : vector<8xf32>
    %58 = vector.multi_reduction <add>, %57, %cst_27 [1] : vector<8x8xf32> to vector<8xf32>
    %59 = vector.shape_cast %58 : vector<8xf32> to vector<8x1xf32>
    %cst_28 = arith.constant dense<0.000000e+00> : vector<8x8xf32>
    %60 = tpu.matmul %57, %51, %cst_28 {dimension_numbers = #tpu.dot_dimension_numbers<[1], [0], [0], [1], [0, 0, 1, 1], [], []>} : vector<8x8xf32>, vector<8x8xf32>, vector<8x8xf32> -> vector<8x8xf32>
    %61 = tpu.reciprocal %59 : vector<8x1xf32> -> vector<8x1xf32>
    %62 = vector.broadcast %61 : vector<8x1xf32> to vector<8x8xf32>
    %63 = arith.mulf %60, %62 : vector<8x8xf32>
    %c104 = arith.constant 104 : index
    %c0_29 = arith.constant 0 : index
    %64 = vector.load %arg4[%c104, %c0_29] : memref<128x32xf32, #tpu.memory_space<vmem>>, vector<8x32xf32>
    %cst_30 = arith.constant dense<0.000000e+00> : vector<8x32xf32>
    %65 = tpu.matmul %63, %64, %cst_30 {dimension_numbers = #tpu.dot_dimension_numbers<[1], [0], [0], [1], [0, 0, 1, 1], [], []>} : vector<8x8xf32>, vector<8x32xf32>, vector<8x32xf32> -> vector<8x32xf32>
    %66 = arith.addf %48, %65 : vector<8x32xf32>
    %67 = vector.extract_strided_slice %14 {offsets = [0, 16], sizes = [8, 8], strides = [1, 1]} : vector<8x32xf32> to vector<8x8xf32>
    %68 = vector.extract_strided_slice %20 {offsets = [0, 16], sizes = [8, 8], strides = [1, 1]} : vector<8x32xf32> to vector<8x8xf32>
    %69 = vector.extract_strided_slice %26 {offsets = [0, 16], sizes = [8, 8], strides = [1, 1]} : vector<8x32xf32> to vector<8x8xf32>
    %cst_31 = arith.constant dense<0.000000e+00> : vector<8x8xf32>
    %70 = tpu.matmul %67, %68, %cst_31 {dimension_numbers = #tpu.dot_dimension_numbers<[1], [1], [0], [0], [0, 0, 1, 0], [], []>} : vector<8x8xf32>, vector<8x8xf32>, vector<8x8xf32> -> vector<8x8xf32>
    %cst_32 = arith.constant dense<0xFF800000> : vector<8xf32>
    %71 = vector.multi_reduction <maximumf>, %70, %cst_32 [1] : vector<8x8xf32> to vector<8xf32>
    %72 = vector.shape_cast %71 : vector<8xf32> to vector<8x1xf32>
    %73 = vector.broadcast %72 : vector<8x1xf32> to vector<8x8xf32>
    %74 = arith.subf %70, %73 : vector<8x8xf32>
    %75 = math.exp %74 : vector<8x8xf32>
    %cst_33 = arith.constant dense<0.000000e+00> : vector<8xf32>
    %76 = vector.multi_reduction <add>, %75, %cst_33 [1] : vector<8x8xf32> to vector<8xf32>
    %77 = vector.shape_cast %76 : vector<8xf32> to vector<8x1xf32>
    %cst_34 = arith.constant dense<0.000000e+00> : vector<8x8xf32>
    %78 = tpu.matmul %75, %69, %cst_34 {dimension_numbers = #tpu.dot_dimension_numbers<[1], [0], [0], [1], [0, 0, 1, 1], [], []>} : vector<8x8xf32>, vector<8x8xf32>, vector<8x8xf32> -> vector<8x8xf32>
    %79 = tpu.reciprocal %77 : vector<8x1xf32> -> vector<8x1xf32>
    %80 = vector.broadcast %79 : vector<8x1xf32> to vector<8x8xf32>
    %81 = arith.mulf %78, %80 : vector<8x8xf32>
    %c112 = arith.constant 112 : index
    %c0_35 = arith.constant 0 : index
    %82 = vector.load %arg4[%c112, %c0_35] : memref<128x32xf32, #tpu.memory_space<vmem>>, vector<8x32xf32>
    %cst_36 = arith.constant dense<0.000000e+00> : vector<8x32xf32>
    %83 = tpu.matmul %81, %82, %cst_36 {dimension_numbers = #tpu.dot_dimension_numbers<[1], [0], [0], [1], [0, 0, 1, 1], [], []>} : vector<8x8xf32>, vector<8x32xf32>, vector<8x32xf32> -> vector<8x32xf32>
    %84 = arith.addf %66, %83 : vector<8x32xf32>
    %85 = vector.extract_strided_slice %14 {offsets = [0, 24], sizes = [8, 8], strides = [1, 1]} : vector<8x32xf32> to vector<8x8xf32>
    %86 = vector.extract_strided_slice %20 {offsets = [0, 24], sizes = [8, 8], strides = [1, 1]} : vector<8x32xf32> to vector<8x8xf32>
    %87 = vector.extract_strided_slice %26 {offsets = [0, 24], sizes = [8, 8], strides = [1, 1]} : vector<8x32xf32> to vector<8x8xf32>
    %cst_37 = arith.constant dense<0.000000e+00> : vector<8x8xf32>
    %88 = tpu.matmul %85, %86, %cst_37 {dimension_numbers = #tpu.dot_dimension_numbers<[1], [1], [0], [0], [0, 0, 1, 0], [], []>} : vector<8x8xf32>, vector<8x8xf32>, vector<8x8xf32> -> vector<8x8xf32>
    %cst_38 = arith.constant dense<0xFF800000> : vector<8xf32>
    %89 = vector.multi_reduction <maximumf>, %88, %cst_38 [1] : vector<8x8xf32> to vector<8xf32>
    %90 = vector.shape_cast %89 : vector<8xf32> to vector<8x1xf32>
    %91 = vector.broadcast %90 : vector<8x1xf32> to vector<8x8xf32>
    %92 = arith.subf %88, %91 : vector<8x8xf32>
    %93 = math.exp %92 : vector<8x8xf32>
    %cst_39 = arith.constant dense<0.000000e+00> : vector<8xf32>
    %94 = vector.multi_reduction <add>, %93, %cst_39 [1] : vector<8x8xf32> to vector<8xf32>
    %95 = vector.shape_cast %94 : vector<8xf32> to vector<8x1xf32>
    %cst_40 = arith.constant dense<0.000000e+00> : vector<8x8xf32>
    %96 = tpu.matmul %93, %87, %cst_40 {dimension_numbers = #tpu.dot_dimension_numbers<[1], [0], [0], [1], [0, 0, 1, 1], [], []>} : vector<8x8xf32>, vector<8x8xf32>, vector<8x8xf32> -> vector<8x8xf32>
    %97 = tpu.reciprocal %95 : vector<8x1xf32> -> vector<8x1xf32>
    %98 = vector.broadcast %97 : vector<8x1xf32> to vector<8x8xf32>
    %99 = arith.mulf %96, %98 : vector<8x8xf32>
    %c120 = arith.constant 120 : index
    %c0_41 = arith.constant 0 : index
    %100 = vector.load %arg4[%c120, %c0_41] : memref<128x32xf32, #tpu.memory_space<vmem>>, vector<8x32xf32>
    %cst_42 = arith.constant dense<0.000000e+00> : vector<8x32xf32>
    %101 = tpu.matmul %99, %100, %cst_42 {dimension_numbers = #tpu.dot_dimension_numbers<[1], [0], [0], [1], [0, 0, 1, 1], [], []>} : vector<8x8xf32>, vector<8x32xf32>, vector<8x32xf32> -> vector<8x32xf32>
    %102 = arith.addf %84, %101 : vector<8x32xf32>
    %c0_43 = arith.constant 0 : index
    %c0_44 = arith.constant 0 : index
    %c0_45 = arith.constant 0 : index
    %103 = vector.load %arg6[%c0_43, %c0_44, %c0_45] : memref<1x8x32xf32, #tpu.memory_space<vmem>>, vector<1x8x32xf32>
    %104 = vector.shape_cast %103 : vector<1x8x32xf32> to vector<8x32xf32>
    %105 = vector.shape_cast %102 : vector<8x32xf32> to vector<1x8x32xf32>
    tpu.vector_store %arg6[%c0_43, %c0_44, %c0_45], %105 {strides = array<i32>} : memref<1x8x32xf32, #tpu.memory_space<vmem>>, vector<1x8x32xf32>,
    return
  }
  func.func @transform_0(%arg0: i32) -> (i32, i32, i32) {
    %c0_i32 = arith.constant 0 : i32
    %c0_i32_0 = arith.constant 0 : i32
    %c0_i32_1 = arith.constant 0 : i32
    return %arg0, %c0_i32, %c0_i32_0 : i32, i32, i32
  }
  func.func @transform_1(%arg0: i32) -> (i32, i32, i32) {
    %c0_i32 = arith.constant 0 : i32
    %c0_i32_0 = arith.constant 0 : i32
    %c0_i32_1 = arith.constant 0 : i32
    return %arg0, %c0_i32, %c0_i32_0 : i32, i32, i32
  }
  func.func @transform_2(%arg0: i32) -> (i32, i32, i32) {
    %c0_i32 = arith.constant 0 : i32
    %c0_i32_0 = arith.constant 0 : i32
    %c0_i32_1 = arith.constant 0 : i32
    return %arg0, %c0_i32, %c0_i32_0 : i32, i32, i32
  }
  func.func @transform_3(%arg0: i32) -> (i32, i32) {
    %c0_i32 = arith.constant 0 : i32
    %c0_i32_0 = arith.constant 0 : i32
    %c0_i32_1 = arith.constant 0 : i32
    return %c0_i32, %c0_i32_0 : i32, i32
  }
  func.func @transform_4(%arg0: i32) -> (i32, i32) {
    %c0_i32 = arith.constant 0 : i32
    %c0_i32_0 = arith.constant 0 : i32
    %c0_i32_1 = arith.constant 0 : i32
    return %c0_i32, %c0_i32_0 : i32, i32
  }
  func.func @transform_5(%arg0: i32) -> (i32, i32, i32) {
    %c0_i32 = arith.constant 0 : i32
    %c0_i32_0 = arith.constant 0 : i32
    %c0_i32_1 = arith.constant 0 : i32
    return %arg0, %c0_i32, %c0_i32_0 : i32, i32, i32
  }
}

</mosaic_0001>

<llo_original>
// kernel: tpu_custom_call.1
$region0: #{tpu_custom_call.1}
  #allocation0 [shape = 'u32[]', space=smem, size = 0x4, offset = 0x4, fixed_abs, tag = 'smem constant byte address 0x4 - core index']
  #allocation1 [shape = 'u32[144,128]{1,0:T(1,128)}', space=vmem, size = 0x12000, scoped, tag = 'internal scratch']
  %s0 = inlined_call_operand.vmem [shape: f32[2,8,32], index: 0, kind: input, shape index: {}]
  %s1 = inlined_call_operand.vmem [shape: f32[2,8,32], index: 1, kind: input, shape index: {}]
  %s2 = inlined_call_operand.vmem [shape: f32[2,8,32], index: 2, kind: input, shape index: {}]
  %s3 = inlined_call_operand.vmem [shape: f32[128,32], index: 3, kind: input, shape index: {}]
  %s4 = inlined_call_operand.vmem [shape: f32[4,32], index: 4, kind: input, shape index: {}]
  %s5 = inlined_call_operand.hbm [shape: f32[2,8,32], index: 5, kind: output, shape index: {}]
  %s6 = sld [smem:[#allocation0]]
  $region53: #{tpu_custom_call.1} parent=0
    _
  %s8 = ssub.s32 1, %s6
  %s9 = scalar_select 0, %s8, %s6
  $region1: #{tpu_custom_call.1} parent=0
    #allocation2 [shape = 'u8[8192]{0}', space=vmem, size = 0x2000, scoped, tag = 'output window, operand 0']
    #allocation3 [shape = 's32[2]{0}', space=sflag, size = 0x8, scoped, tag = 'scoped memory for tpu_custom_call.1']
    %10 = vsyncpa [#allocation3], 0
    %s11 = scalar_lea.sflag [#allocation3], 1
    %12 = vsyncpa %s11, 0
    loop: start=0, step=1, limit=4
    $region2: #{tpu_custom_call.1} parent=1 // loop_pre_header
      _
    $region3: #{tpu_custom_call.1} parent=1 // loop_header
      %s14 = sphi 0, %s18
      %p15 = scmp.ge.s32.totalorder %s14, 4
      %s24 = sphi 0, %s26
      %s27 = sphi 0, %s24
      %s28 = sphi 0, %s27
      %s44 = sphi 0, %s28
      %s50 = sphi 0, %s52
      %s53 = sphi 0, %s50
      %s54 = sphi 0, %s53
      %s70 = sphi 0, %s54
      %s76 = sphi 0, %s78
      %s79 = sphi 0, %s76
      %s80 = sphi 0, %s79
      %s96 = sphi 0, %s80
      %s100 = sphi 0, %s100
      %s102 = sphi 0, %s100
      %s103 = sphi 0, %s102
      %s117 = sphi 0, %s103
      %s121 = sphi 0, %s121
      %s123 = sphi 0, %s121
      %s124 = sphi 0, %s123
      %s138 = sphi 0, %s124
      %s144 = sphi 0, %s146
      %s147 = sphi 0, %s144
      %s148 = sphi 0, %s147
      %s164 = sphi 0, %s148
    $region4: #{tpu_custom_call.1} parent=1 // loop_header_branch
      %17 = sbr.rel (%p15) target = $region8
    $region5: #{tpu_custom_call.1} parent=1 // loop_body
      %s19 = ssub.s32 %s14, 1
      %s20 = ssub.s32 %s14, 2
      %s21 = sadd.s32 %s14, 1
      %s22 = ssub.s32 %s14, %s21
      %p23 = scmp.eq.s32.totalorder %s22, 0
      %s25 = sadd.s32 %s24, 1
      %s26 = scalar_select %p23, %s24, %s25
      %p29 = pneg %p23
      %p30 = scmp.eq.s32.totalorder %s14, 1
      %p31 = por %p29, %p30
      %p32 = scmp.ne.s32.totalorder %s24, %s27
      %p33 = scmp.eq.s32.totalorder %s14, 0
      %p34 = por %p32, %p33
      %p35 = scmp.ne.s32.totalorder %s24, %s27
      %p36 = scmp.eq.s32.totalorder %s19, 1
      %p37 = por %p35, %p36
      %p38 = scmp.ne.s32.totalorder %s27, %s28
      %p39 = scmp.eq.s32.totalorder %s19, 0
      %p40 = por %p38, %p39
      %p41 = scmp.ne.s32.totalorder %s27, %s28
      %p42 = scmp.eq.s32.totalorder %s20, 1
      %p43 = por %p41, %p42
      %p45 = scmp.ne.s32.totalorder %s28, %s44
      %p46 = scmp.eq.s32.totalorder %s20, 0
      %p47 = por %p45, %p46
      %s48 = ssub.s32 %s14, %s21
      %p49 = scmp.eq.s32.totalorder %s48, 0
      %s51 = sadd.s32 %s50, 1
      %s52 = scalar_select %p49, %s50, %s51
      %p55 = pneg %p49
      %p56 = scmp.eq.s32.totalorder %s14, 1
      %p57 = por %p55, %p56
      %p58 = scmp.ne.s32.totalorder %s50, %s53
      %p59 = scmp.eq.s32.totalorder %s14, 0
      %p60 = por %p58, %p59
      %p61 = scmp.ne.s32.totalorder %s50, %s53
      %p62 = scmp.eq.s32.totalorder %s19, 1
      %p63 = por %p61, %p62
      %p64 = scmp.ne.s32.totalorder %s53, %s54
      %p65 = scmp.eq.s32.totalorder %s19, 0
      %p66 = por %p64, %p65
      %p67 = scmp.ne.s32.totalorder %s53, %s54
      %p68 = scmp.eq.s32.totalorder %s20, 1
      %p69 = por %p67, %p68
      %p71 = scmp.ne.s32.totalorder %s54, %s70
      %p72 = scmp.eq.s32.totalorder %s20, 0
      %p73 = por %p71, %p72
      %s74 = ssub.s32 %s14, %s21
      %p75 = scmp.eq.s32.totalorder %s74, 0
      %s77 = sadd.s32 %s76, 1
      %s78 = scalar_select %p75, %s76, %s77
      %p81 = pneg %p75
      %p82 = scmp.eq.s32.totalorder %s14, 1
      %p83 = por %p81, %p82
      %p84 = scmp.ne.s32.totalorder %s76, %s79
      %p85 = scmp.eq.s32.totalorder %s14, 0
      %p86 = por %p84, %p85
      %p87 = scmp.ne.s32.totalorder %s76, %s79
      %p88 = scmp.eq.s32.totalorder %s19, 1
      %p89 = por %p87, %p88
      %p90 = scmp.ne.s32.totalorder %s79, %s80
      %p91 = scmp.eq.s32.totalorder %s19, 0
      %p92 = por %p90, %p91
      %p93 = scmp.ne.s32.totalorder %s79, %s80
      %p94 = scmp.eq.s32.totalorder %s20, 1
      %p95 = por %p93, %p94
      %p97 = scmp.ne.s32.totalorder %s80, %s96
      %p98 = scmp.eq.s32.totalorder %s20, 0
      %p99 = por %p97, %p98
      %s101 = sadd.s32 %s100, 1
      %p104 = scmp.eq.s32.totalorder %s14, 1
      %p105 = scmp.ne.s32.totalorder %s100, %s102
      %p106 = scmp.eq.s32.totalorder %s14, 0
      %p107 = por %p105, %p106
      %p108 = scmp.ne.s32.totalorder %s100, %s102
      %p109 = scmp.eq.s32.totalorder %s19, 1
      %p110 = por %p108, %p109
      %p111 = scmp.ne.s32.totalorder %s102, %s103
      %p112 = scmp.eq.s32.totalorder %s19, 0
      %p113 = por %p111, %p112
      %p114 = scmp.ne.s32.totalorder %s102, %s103
      %p115 = scmp.eq.s32.totalorder %s20, 1
      %p116 = por %p114, %p115
      %p118 = scmp.ne.s32.totalorder %s103, %s117
      %p119 = scmp.eq.s32.totalorder %s20, 0
      %p120 = por %p118, %p119
      %s122 = sadd.s32 %s121, 1
      %p125 = scmp.eq.s32.totalorder %s14, 1
      %p126 = scmp.ne.s32.totalorder %s121, %s123
      %p127 = scmp.eq.s32.totalorder %s14, 0
      %p128 = por %p126, %p127
      %p129 = scmp.ne.s32.totalorder %s121, %s123
      %p130 = scmp.eq.s32.totalorder %s19, 1
      %p131 = por %p129, %p130
      %p132 = scmp.ne.s32.totalorder %s123, %s124
      %p133 = scmp.eq.s32.totalorder %s19, 0
      %p134 = por %p132, %p133
      %p135 = scmp.ne.s32.totalorder %s123, %s124
      %p136 = scmp.eq.s32.totalorder %s20, 1
      %p137 = por %p135, %p136
      %p139 = scmp.ne.s32.totalorder %s124, %s138
      %p140 = scmp.eq.s32.totalorder %s20, 0
      %p141 = por %p139, %p140
      %s142 = ssub.s32 %s14, %s21
      %p143 = scmp.eq.s32.totalorder %s142, 0
      %s145 = sadd.s32 %s144, 1
      %s146 = scalar_select %p143, %s144, %s145
      %p149 = pneg %p143
      %p150 = scmp.eq.s32.totalorder %s14, 1
      %p151 = por %p149, %p150
      %p152 = scmp.ne.s32.totalorder %s144, %s147
      %p153 = scmp.eq.s32.totalorder %s14, 0
      %p154 = por %p152, %p153
      %p155 = scmp.ne.s32.totalorder %s144, %s147
      %p156 = scmp.eq.s32.totalorder %s19, 1
      %p157 = por %p155, %p156
      %p158 = scmp.ne.s32.totalorder %s147, %s148
      %p159 = scmp.eq.s32.totalorder %s19, 0
      %p160 = por %p158, %p159
      %p161 = scmp.ne.s32.totalorder %s147, %s148
      %p162 = scmp.eq.s32.totalorder %s20, 1
      %p163 = por %p161, %p162
      %p165 = scmp.ne.s32.totalorder %s148, %s164
      %p166 = scmp.eq.s32.totalorder %s20, 0
      %p167 = por %p165, %p166
      %p168 = scmp.le.s32.totalorder 1, %s14
      %p169 = scmp.lt.s32.totalorder %s14, 3
      %p170 = pnand %p168, %p169
      %p171 = pneg %p170
      // Predicated region
      $region9: #{tpu_custom_call.1} parent=5 // pred_check
        _
      $region10: #{tpu_custom_call.1} parent=5 // pred_check_branch
        %173 = sbr.rel (%p170) target = $region12
      $region11: #{tpu_custom_call.1} parent=5 // pred_region
        %s174 = ssub.s32 %s14, 1
        // Predicated region
        $region13: #{tpu_custom_call.1} parent=11 // pred_check
          %p175 = pneg %p113
        $region14: #{tpu_custom_call.1} parent=11 // pred_check_branch
          %177 = sbr.rel (%p175) target = $region16
        $region15: #{tpu_custom_call.1} parent=11 // pred_region
          _
        $region16: #{tpu_custom_call.1} parent=11 // pred_fallthru
          _
        // Predicated region
        $region17: #{tpu_custom_call.1} parent=11 // pred_check
          %p178 = pneg %p134
        $region18: #{tpu_custom_call.1} parent=11 // pred_check_branch
          %180 = sbr.rel (%p178) target = $region20
        $region19: #{tpu_custom_call.1} parent=11 // pred_region
          _
        $region20: #{tpu_custom_call.1} parent=11 // pred_fallthru
          _
      $region12: #{tpu_custom_call.1} parent=5 // pred_fallthru
        _
      %p181 = scmp.lt.s32.totalorder %s14, 2
      // Predicated region
      $region21: #{tpu_custom_call.1} parent=5 // pred_check
        %p182 = pneg %p181
      $region22: #{tpu_custom_call.1} parent=5 // pred_check_branch
        %184 = sbr.rel (%p182) target = $region24
      $region23: #{tpu_custom_call.1} parent=5 // pred_region
        // Predicated region
        $region25: #{tpu_custom_call.1} parent=23 // pred_check
          %p185 = pneg %p34
        $region26: #{tpu_custom_call.1} parent=23 // pred_check_branch
          %187 = sbr.rel (%p185) target = $region28
        $region27: #{tpu_custom_call.1} parent=23 // pred_region
          %p188 = scmp.lt.s32.totalorder %s14, 1
          %s189 = scalar_select %p188, %s14, 1
          %s190 = smul.addr %s189, 8
          %s191 = scalar_lea.vmem %s0, %s190
        $region28: #{tpu_custom_call.1} parent=23 // pred_fallthru
          _
        // Predicated region
        $region29: #{tpu_custom_call.1} parent=23 // pred_check
          %p192 = pneg %p60
        $region30: #{tpu_custom_call.1} parent=23 // pred_check_branch
          %194 = sbr.rel (%p192) target = $region32
        $region31: #{tpu_custom_call.1} parent=23 // pred_region
          %p195 = scmp.lt.s32.totalorder %s14, 1
          %s196 = scalar_select %p195, %s14, 1
          %s197 = smul.addr %s196, 8
          %s198 = scalar_lea.vmem %s1, %s197
        $region32: #{tpu_custom_call.1} parent=23 // pred_fallthru
          _
        // Predicated region
        $region33: #{tpu_custom_call.1} parent=23 // pred_check
          %p199 = pneg %p86
        $region34: #{tpu_custom_call.1} parent=23 // pred_check_branch
          %201 = sbr.rel (%p199) target = $region36
        $region35: #{tpu_custom_call.1} parent=23 // pred_region
          %p202 = scmp.lt.s32.totalorder %s14, 1
          %s203 = scalar_select %p202, %s14, 1
          %s204 = smul.addr %s203, 8
          %s205 = scalar_lea.vmem %s2, %s204
        $region36: #{tpu_custom_call.1} parent=23 // pred_fallthru
          _
      $region24: #{tpu_custom_call.1} parent=5 // pred_fallthru
        _
      %p206 = scmp.le.s32.totalorder 1, %s14
      %p207 = scmp.lt.s32.totalorder %s14, 3
      %p208 = pnand %p206, %p207
      %p209 = pneg %p208
      // Predicated region
      $region37: #{tpu_custom_call.1} parent=5 // pred_check
        _
      $region38: #{tpu_custom_call.1} parent=5 // pred_check_branch
        %211 = sbr.rel (%p208) target = $region40
      $region39: #{tpu_custom_call.1} parent=5 // pred_region
        %s212 = ssub.s32 %s14, 1
        %p213 = scmp.lt.s32.totalorder %s19, 1
        %s214 = scalar_select %p213, %s19, 1
        %s215 = smul.addr %s214, 8
        %s216 = scalar_lea.vmem %s0, %s215
        %p217 = pneg %p40
        %p218 = pneg %p37
        %p219 = scmp.lt.s32.totalorder %s19, 1
        %s220 = scalar_select %p219, %s19, 1
        %s221 = smul.addr %s220, 8
        %s222 = scalar_lea.vmem %s1, %s221
        %p223 = pneg %p66
        %p224 = pneg %p63
        %p225 = scmp.lt.s32.totalorder %s19, 1
        %s226 = scalar_select %p225, %s19, 1
        %s227 = smul.addr %s226, 8
        %s228 = scalar_lea.vmem %s2, %s227
        %p229 = pneg %p92
        %p230 = pneg %p89
        %p231 = pneg %p113
        %p232 = pneg %p110
        %p233 = pneg %p134
        %p234 = pneg %p131
        %p235 = pneg %p160
        %p236 = pneg %p157
        %s237 = sand.u32 %s147, 1
        %s238 = scalar_lea.sflag [#allocation3], %s237
        %s239 = sand.u32 %s147, 1
        %s240 = smul.addr %s239, 8
        %s241 = scalar_lea.vmem [#allocation2], %s240
        %p242 = scmp.lt.s32.totalorder %s19, 1
        %s243 = scalar_select %p242, %s19, 1
        %s244 = smul.addr %s243, 8
        %s245 = scalar_lea.vmem %s0, %s244
        %p246 = scmp.lt.s32.totalorder %s19, 1
        %s247 = scalar_select %p246, %s19, 1
        %s248 = smul.addr %s247, 8
        %s249 = scalar_lea.vmem %s1, %s248
        %p250 = scmp.lt.s32.totalorder %s19, 1
        %s251 = scalar_select %p250, %s19, 1
        %s252 = smul.addr %s251, 8
        %s253 = scalar_lea.vmem %s2, %s252
        %v254 = vld [vmem:[%s245] sm:$0xff]
        %v255 = vld [vmem:[%s249] sm:$0xff]
        %v256 = vld [vmem:[%s253] sm:$0xff]
        %v257 = vld [vmem:[%s3] sm:$0xff]
        %v258 = vld [vmem:[%s3 + $0x8] sm:$0xff]
        %v259 = vld [vmem:[%s3 + $0x10] sm:$0xff]
        %v260 = vld [vmem:[%s3 + $0x18] sm:$0xff]
        %v261 = vld [vmem:[%s3 + $0x20] sm:$0xff]
        %v262 = vld [vmem:[%s3 + $0x28] sm:$0xff]
        %v263 = vld [vmem:[%s3 + $0x30] sm:$0xff]
        %v264 = vld [vmem:[%s3 + $0x38] sm:$0xff]
        %v265 = vld [vmem:[%s3 + $0x40] sm:$0xff]
        %v266 = vld [vmem:[%s3 + $0x48] sm:$0xff]
        %v267 = vld [vmem:[%s3 + $0x50] sm:$0xff]
        %v268 = vld [vmem:[%s3 + $0x58] sm:$0xff]
        %v269 = vld [vmem:[%s4] sm:$0x1]
        %v270 = vlaneseq
        %v271 = vshrl.u32 %v270, 7
        %v272 = vsub.s32 0, %v271
        %v273 = vrot.slane %v269, %v272
        %vm274 = vcmask 261120
        %v276 = vsel %vm274, %v254, 0
        %278 = vmatprep.subr.mxu0 0.0
        %279 = vmatpush1.msra.mxu0 %v257
        %280 = vmatprep.subr.mxu0 0.0
        %281 = vmatpush1.msra.mxu0 %v258
        %282 = vmatprep.subr.mxu0 0.0
        %283 = vmatpush1.msra.mxu0 %v259
        %284 = vmatprep.subr.mxu0 0.0
        %285 = vmatpush1.msra.mxu0 %v260
        %286 = vmatprep.subr.mxu0 0.0
        %287 = vmatpush1.msra.mxu0 0.0
        %288 = vmatprep.subr.mxu0 0.0
        %289 = vmatpush1.msra.mxu0 0.0
        %290 = vmatprep.subr.mxu0 0.0
        %291 = vmatpush1.msra.mxu0 0.0
        %292 = vmatprep.subr.mxu0 0.0
        %293 = vmatpush1.msra.mxu0 0.0
        %294 = vmatprep.subr.mxu0 0.0
        %295 = vmatpush1.msra.mxu0 0.0
        %296 = vmatprep.subr.mxu0 0.0
        %297 = vmatpush1.msra.mxu0 0.0
        %298 = vmatprep.subr.mxu0 0.0
        %299 = vmatpush1.msra.mxu0 0.0
        %300 = vmatprep.subr.mxu0 0.0
        %301 = vmatpush1.msra.mxu0 0.0
        %302 = vmatprep.subr.mxu0 0.0
        %303 = vmatpush1.msra.mxu0 0.0
        %304 = vmatprep.subr.mxu0 0.0
        %305 = vmatpush1.msra.mxu0 0.0
        %306 = vmatprep.subr.mxu0 0.0
        %307 = vmatpush1.msra.mxu0 0.0
        %308 = vmatprep.subr.mxu0 0.0
        %309 = vmatpush1.msra.mxu0 0.0
        %310 = vmatprep.subr.mxu0 0.0
        %311 = vmatpush1.msra.mxu0 0.0
        %312 = vmatprep.subr.mxu0 0.0
        %313 = vmatpush1.msra.mxu0 0.0
        %314 = vmatprep.subr.mxu0 0.0
        %315 = vmatpush1.msra.mxu0 0.0
        %316 = vmatprep.subr.mxu0 0.0
        %317 = vmatpush1.msra.mxu0 0.0
        %318 = vmatprep.subr.mxu0 0.0
        %319 = vmatpush1.msra.mxu0 0.0
        %320 = vmatprep.subr.mxu0 0.0
        %321 = vmatpush1.msra.mxu0 0.0
        %322 = vmatprep.subr.mxu0 0.0
        %323 = vmatpush1.msra.mxu0 0.0
        %324 = vmatprep.subr.mxu0 0.0
        %325 = vmatpush1.msra.mxu0 0.0
        %326 = vmatprep.subr.mxu0 0.0
        %327 = vmatpush1.msra.mxu0 0.0
        %328 = vmatprep.subr.mxu0 0.0
        %329 = vmatpush1.msra.mxu0 0.0
        %330 = vmatprep.subr.mxu0 0.0
        %331 = vmatpush1.msra.mxu0 0.0
        %332 = vmatprep.subr.mxu0 0.0
        %333 = vmatpush1.msra.mxu0 0.0
        %334 = vmatprep.subr.mxu0 0.0
        %335 = vmatpush1.msra.mxu0 0.0
        %336 = vmatprep.subr.mxu0 0.0
        %337 = vmatpush1.msra.mxu0 0.0
        %338 = vmatprep.subr.mxu0 0.0
        %339 = vmatpush1.msra.mxu0 0.0
        %340 = vmatprep.subr.mxu0 0.0
        %341 = vmatpush1.msra.mxu0 0.0
        %342 = vmatprep.mubr.f32.mxu0 0.0
        %343 = vmatmul.mubr.f32.gmra.mrb[0].mxu0 %v276
        %v344 = vpop.f32.mrb[0].mxu0
        %v345 = vadd.f32 %v273, %v344
        %v346 = vpop.f32.mrb[0].mxu0
        %347 = vdwg.mxu0
        %v348 = vld [vmem:[%s4 + $0x1] sm:$0x1]
        %v349 = vlaneseq
        %v350 = vshrl.u32 %v349, 7
        %v351 = vsub.s32 0, %v350
        %v352 = vrot.slane %v348, %v351
        %v354 = vsel %vm274, %v255, 0
        %356 = vmatprep.subr.mxu0 0.0
        %357 = vmatpush1.msra.mxu0 %v261
        %358 = vmatprep.subr.mxu0 0.0
        %359 = vmatpush1.msra.mxu0 %v262
        %360 = vmatprep.subr.mxu0 0.0
        %361 = vmatpush1.msra.mxu0 %v263
        %362 = vmatprep.subr.mxu0 0.0
        %363 = vmatpush1.msra.mxu0 %v264
        %364 = vmatprep.subr.mxu0 0.0
        %365 = vmatpush1.msra.mxu0 0.0
        %366 = vmatprep.subr.mxu0 0.0
        %367 = vmatpush1.msra.mxu0 0.0
        %368 = vmatprep.subr.mxu0 0.0
        %369 = vmatpush1.msra.mxu0 0.0
        %370 = vmatprep.subr.mxu0 0.0
        %371 = vmatpush1.msra.mxu0 0.0
        %372 = vmatprep.subr.mxu0 0.0
        %373 = vmatpush1.msra.mxu0 0.0
        %374 = vmatprep.subr.mxu0 0.0
        %375 = vmatpush1.msra.mxu0 0.0
        %376 = vmatprep.subr.mxu0 0.0
        %377 = vmatpush1.msra.mxu0 0.0
        %378 = vmatprep.subr.mxu0 0.0
        %379 = vmatpush1.msra.mxu0 0.0
        %380 = vmatprep.subr.mxu0 0.0
        %381 = vmatpush1.msra.mxu0 0.0
        %382 = vmatprep.subr.mxu0 0.0
        %383 = vmatpush1.msra.mxu0 0.0
        %384 = vmatprep.subr.mxu0 0.0
        %385 = vmatpush1.msra.mxu0 0.0
        %386 = vmatprep.subr.mxu0 0.0
        %387 = vmatpush1.msra.mxu0 0.0
        %388 = vmatprep.subr.mxu0 0.0
        %389 = vmatpush1.msra.mxu0 0.0
        %390 = vmatprep.subr.mxu0 0.0
        %391 = vmatpush1.msra.mxu0 0.0
        %392 = vmatprep.subr.mxu0 0.0
        %393 = vmatpush1.msra.mxu0 0.0
        %394 = vmatprep.subr.mxu0 0.0
        %395 = vmatpush1.msra.mxu0 0.0
        %396 = vmatprep.subr.mxu0 0.0
        %397 = vmatpush1.msra.mxu0 0.0
        %398 = vmatprep.subr.mxu0 0.0
        %399 = vmatpush1.msra.mxu0 0.0
        %400 = vmatprep.subr.mxu0 0.0
        %401 = vmatpush1.msra.mxu0 0.0
        %402 = vmatprep.subr.mxu0 0.0
        %403 = vmatpush1.msra.mxu0 0.0
        %404 = vmatprep.subr.mxu0 0.0
        %405 = vmatpush1.msra.mxu0 0.0
        %406 = vmatprep.subr.mxu0 0.0
        %407 = vmatpush1.msra.mxu0 0.0
        %408 = vmatprep.subr.mxu0 0.0
        %409 = vmatpush1.msra.mxu0 0.0
        %410 = vmatprep.subr.mxu0 0.0
        %411 = vmatpush1.msra.mxu0 0.0
        %412 = vmatprep.subr.mxu0 0.0
        %413 = vmatpush1.msra.mxu0 0.0
        %414 = vmatprep.subr.mxu0 0.0
        %415 = vmatpush1.msra.mxu0 0.0
        %416 = vmatprep.subr.mxu0 0.0
        %417 = vmatpush1.msra.mxu0 0.0
        %418 = vmatprep.subr.mxu0 0.0
        %419 = vmatpush1.msra.mxu0 0.0
        %420 = vmatprep.mubr.f32.mxu0 0.0
        %421 = vmatmul.mubr.f32.gmra.mrb[0].mxu0 %v354
        %v422 = vpop.f32.mrb[0].mxu0
        %v423 = vadd.f32 %v352, %v422
        %v424 = vpop.f32.mrb[0].mxu0
        %425 = vdwg.mxu0
        %v426 = vld [vmem:[%s4 + $0x2] sm:$0x1]
        %v427 = vlaneseq
        %v428 = vshrl.u32 %v427, 7
        %v429 = vsub.s32 0, %v428
        %v430 = vrot.slane %v426, %v429
        %v432 = vsel %vm274, %v256, 0
        %434 = vmatprep.subr.mxu0 0.0
        %435 = vmatpush1.msra.mxu0 %v265
        %436 = vmatprep.subr.mxu0 0.0
        %437 = vmatpush1.msra.mxu0 %v266
        %438 = vmatprep.subr.mxu0 0.0
        %439 = vmatpush1.msra.mxu0 %v267
        %440 = vmatprep.subr.mxu0 0.0
        %441 = vmatpush1.msra.mxu0 %v268
        %442 = vmatprep.subr.mxu0 0.0
        %443 = vmatpush1.msra.mxu0 0.0
        %444 = vmatprep.subr.mxu0 0.0
        %445 = vmatpush1.msra.mxu0 0.0
        %446 = vmatprep.subr.mxu0 0.0
        %447 = vmatpush1.msra.mxu0 0.0
        %448 = vmatprep.subr.mxu0 0.0
        %449 = vmatpush1.msra.mxu0 0.0
        %450 = vmatprep.subr.mxu0 0.0
        %451 = vmatpush1.msra.mxu0 0.0
        %452 = vmatprep.subr.mxu0 0.0
        %453 = vmatpush1.msra.mxu0 0.0
        %454 = vmatprep.subr.mxu0 0.0
        %455 = vmatpush1.msra.mxu0 0.0
        %456 = vmatprep.subr.mxu0 0.0
        %457 = vmatpush1.msra.mxu0 0.0
        %458 = vmatprep.subr.mxu0 0.0
        %459 = vmatpush1.msra.mxu0 0.0
        %460 = vmatprep.subr.mxu0 0.0
        %461 = vmatpush1.msra.mxu0 0.0
        %462 = vmatprep.subr.mxu0 0.0
        %463 = vmatpush1.msra.mxu0 0.0
        %464 = vmatprep.subr.mxu0 0.0
        %465 = vmatpush1.msra.mxu0 0.0
        %466 = vmatprep.subr.mxu0 0.0
        %467 = vmatpush1.msra.mxu0 0.0
        %468 = vmatprep.subr.mxu0 0.0
        %469 = vmatpush1.msra.mxu0 0.0
        %470 = vmatprep.subr.mxu0 0.0
        %471 = vmatpush1.msra.mxu0 0.0
        %472 = vmatprep.subr.mxu0 0.0
        %473 = vmatpush1.msra.mxu0 0.0
        %474 = vmatprep.subr.mxu0 0.0
        %475 = vmatpush1.msra.mxu0 0.0
        %476 = vmatprep.subr.mxu0 0.0
        %477 = vmatpush1.msra.mxu0 0.0
        %478 = vmatprep.subr.mxu0 0.0
        %479 = vmatpush1.msra.mxu0 0.0
        %480 = vmatprep.subr.mxu0 0.0
        %481 = vmatpush1.msra.mxu0 0.0
        %482 = vmatprep.subr.mxu0 0.0
        %483 = vmatpush1.msra.mxu0 0.0
        %484 = vmatprep.subr.mxu0 0.0
        %485 = vmatpush1.msra.mxu0 0.0
        %486 = vmatprep.subr.mxu0 0.0
        %487 = vmatpush1.msra.mxu0 0.0
        %488 = vmatprep.subr.mxu0 0.0
        %489 = vmatpush1.msra.mxu0 0.0
        %490 = vmatprep.subr.mxu0 0.0
        %491 = vmatpush1.msra.mxu0 0.0
        %492 = vmatprep.subr.mxu0 0.0
        %493 = vmatpush1.msra.mxu0 0.0
        %494 = vmatprep.subr.mxu0 0.0
        %495 = vmatpush1.msra.mxu0 0.0
        %496 = vmatprep.subr.mxu0 0.0
        %497 = vmatpush1.msra.mxu0 0.0
        %498 = vmatprep.mubr.f32.mxu0 0.0
        %499 = vmatmul.mubr.f32.gmra.mrb[0].mxu0 %v432
        %v500 = vpop.f32.mrb[0].mxu0
        %v501 = vadd.f32 %v430, %v500
        %v502 = vpop.f32.mrb[0].mxu0
        %503 = vdwg.mxu0
        %v504 = vld [vmem:[%s4 + $0x3] sm:$0x1]
        %v505 = vlaneseq
        %v506 = vshrl.u32 %v505, 7
        %v507 = vsub.s32 0, %v506
        %v508 = vrot.slane %v504, %v507
        %vm509 = vcmask 64512
        %v511 = vsel %vm509, %v345, 0
        %v514 = vsel %vm509, %v423, 0
        %516 = vmatprep.subr.mxu0 0.0
        %517 = vmatpush1.xpose.msra.mxu0 %v514
        %518 = vmatprep.subr.mxu0 0.0
        %519 = vmatpush1.xpose.msra.mxu0 0.0
        %520 = vmatprep.subr.mxu0 0.0
        %521 = vmatpush1.xpose.msra.mxu0 0.0
        %522 = vmatprep.subr.mxu0 0.0
        %523 = vmatpush1.xpose.msra.mxu0 0.0
        %524 = vmatprep.subr.mxu0 0.0
        %525 = vmatpush1.xpose.msra.mxu0 0.0
        %526 = vmatprep.subr.mxu0 0.0
        %527 = vmatpush1.xpose.msra.mxu0 0.0
        %528 = vmatprep.subr.mxu0 0.0
        %529 = vmatpush1.xpose.msra.mxu0 0.0
        %530 = vmatprep.subr.mxu0 0.0
        %531 = vmatpush1.xpose.msra.mxu0 0.0
        %532 = vmatprep.subr.mxu0 0.0
        %533 = vmatpush1.xpose.msra.mxu0 0.0
        %534 = vmatprep.subr.mxu0 0.0
        %535 = vmatpush1.xpose.msra.mxu0 0.0
        %536 = vmatprep.subr.mxu0 0.0
        %537 = vmatpush1.xpose.msra.mxu0 0.0
        %538 = vmatprep.subr.mxu0 0.0
        %539 = vmatpush1.xpose.msra.mxu0 0.0
        %540 = vmatprep.subr.mxu0 0.0
        %541 = vmatpush1.xpose.msra.mxu0 0.0
        %542 = vmatprep.subr.mxu0 0.0
        %543 = vmatpush1.xpose.msra.mxu0 0.0
        %544 = vmatprep.subr.mxu0 0.0
        %545 = vmatpush1.xpose.msra.mxu0 0.0
        %546 = vmatprep.subr.mxu0 0.0
        %547 = vmatpush1.xpose.msra.mxu0 0.0
        %548 = vmatprep.subr.mxu0 0.0
        %549 = vmatpush1.xpose.msra.mxu0 0.0
        %550 = vmatprep.subr.mxu0 0.0
        %551 = vmatpush1.xpose.msra.mxu0 0.0
        %552 = vmatprep.subr.mxu0 0.0
        %553 = vmatpush1.xpose.msra.mxu0 0.0
        %554 = vmatprep.subr.mxu0 0.0
        %555 = vmatpush1.xpose.msra.mxu0 0.0
        %556 = vmatprep.subr.mxu0 0.0
        %557 = vmatpush1.xpose.msra.mxu0 0.0
        %558 = vmatprep.subr.mxu0 0.0
        %559 = vmatpush1.xpose.msra.mxu0 0.0
        %560 = vmatprep.subr.mxu0 0.0
        %561 = vmatpush1.xpose.msra.mxu0 0.0
        %562 = vmatprep.subr.mxu0 0.0
        %563 = vmatpush1.xpose.msra.mxu0 0.0
        %564 = vmatprep.subr.mxu0 0.0
        %565 = vmatpush1.xpose.msra.mxu0 0.0
        %566 = vmatprep.subr.mxu0 0.0
        %567 = vmatpush1.xpose.msra.mxu0 0.0
        %568 = vmatprep.subr.mxu0 0.0
        %569 = vmatpush1.xpose.msra.mxu0 0.0
        %570 = vmatprep.subr.mxu0 0.0
        %571 = vmatpush1.xpose.msra.mxu0 0.0
        %572 = vmatprep.subr.mxu0 0.0
        %573 = vmatpush1.xpose.msra.mxu0 0.0
        %574 = vmatprep.subr.mxu0 0.0
        %575 = vmatpush1.xpose.msra.mxu0 0.0
        %576 = vmatprep.subr.mxu0 0.0
        %577 = vmatpush1.xpose.msra.mxu0 0.0
        %578 = vmatprep.subr.mxu0 0.0
        %579 = vmatpush1.xpose.msra.mxu0 0.0
        %580 = vmatprep.mubr.f32.mxu0 0.0
        %581 = vmatmul.mubr.f32.gmra.mrb[0].mxu0 %v511
        %v582 = vpop.f32.mrb[0].mxu0
        %v583 = vadd.f32 0.0, %v582
        %v584 = vpop.f32.mrb[0].mxu0
        %585 = vdwg.mxu0
        %v586 = vsel %vm509, %v583, -inf
        %587 = vmax.xlane.f32.xlu0 %v586
        %v588 = vpop.xlane.xlu0 %587
        %v589 = vsub.f32 %v583, %v588
        %v590 = vmul.f32 %v589, 1.442695
        %v591 = vpow.pop %v590
        %v592 = vsel %vm509, %v591, 0.0
        %593 = vadd.xlane.f32.xlu0 %v592
        %v594 = vpop.xlane.xlu0 %593
        %v596 = vsel %vm509, %v591, 0
        %598 = vmatprep.subr.mxu0 0.0
        %599 = vmatpush1.msra.mxu0 %v501
        %600 = vmatprep.subr.mxu0 0.0
        %601 = vmatpush1.msra.mxu0 0.0
        %602 = vmatprep.subr.mxu0 0.0
        %603 = vmatpush1.msra.mxu0 0.0
        %604 = vmatprep.subr.mxu0 0.0
        %605 = vmatpush1.msra.mxu0 0.0
        %606 = vmatprep.subr.mxu0 0.0
        %607 = vmatpush1.msra.mxu0 0.0
        %608 = vmatprep.subr.mxu0 0.0
        %609 = vmatpush1.msra.mxu0 0.0
        %610 = vmatprep.subr.mxu0 0.0
        %611 = vmatpush1.msra.mxu0 0.0
        %612 = vmatprep.subr.mxu0 0.0
        %613 = vmatpush1.msra.mxu0 0.0
        %614 = vmatprep.subr.mxu0 0.0
        %615 = vmatpush1.msra.mxu0 0.0
        %616 = vmatprep.subr.mxu0 0.0
        %617 = vmatpush1.msra.mxu0 0.0
        %618 = vmatprep.subr.mxu0 0.0
        %619 = vmatpush1.msra.mxu0 0.0
        %620 = vmatprep.subr.mxu0 0.0
        %621 = vmatpush1.msra.mxu0 0.0
        %622 = vmatprep.subr.mxu0 0.0
        %623 = vmatpush1.msra.mxu0 0.0
        %624 = vmatprep.subr.mxu0 0.0
        %625 = vmatpush1.msra.mxu0 0.0
        %626 = vmatprep.subr.mxu0 0.0
        %627 = vmatpush1.msra.mxu0 0.0
        %628 = vmatprep.subr.mxu0 0.0
        %629 = vmatpush1.msra.mxu0 0.0
        %630 = vmatprep.subr.mxu0 0.0
        %631 = vmatpush1.msra.mxu0 0.0
        %632 = vmatprep.subr.mxu0 0.0
        %633 = vmatpush1.msra.mxu0 0.0
        %634 = vmatprep.subr.mxu0 0.0
        %635 = vmatpush1.msra.mxu0 0.0
        %636 = vmatprep.subr.mxu0 0.0
        %637 = vmatpush1.msra.mxu0 0.0
        %638 = vmatprep.subr.mxu0 0.0
        %639 = vmatpush1.msra.mxu0 0.0
        %640 = vmatprep.subr.mxu0 0.0
        %641 = vmatpush1.msra.mxu0 0.0
        %642 = vmatprep.subr.mxu0 0.0
        %643 = vmatpush1.msra.mxu0 0.0
        %644 = vmatprep.subr.mxu0 0.0
        %645 = vmatpush1.msra.mxu0 0.0
        %646 = vmatprep.subr.mxu0 0.0
        %647 = vmatpush1.msra.mxu0 0.0
        %648 = vmatprep.subr.mxu0 0.0
        %649 = vmatpush1.msra.mxu0 0.0
        %650 = vmatprep.subr.mxu0 0.0
        %651 = vmatpush1.msra.mxu0 0.0
        %652 = vmatprep.subr.mxu0 0.0
        %653 = vmatpush1.msra.mxu0 0.0
        %654 = vmatprep.subr.mxu0 0.0
        %655 = vmatpush1.msra.mxu0 0.0
        %656 = vmatprep.subr.mxu0 0.0
        %657 = vmatpush1.msra.mxu0 0.0
        %658 = vmatprep.subr.mxu0 0.0
        %659 = vmatpush1.msra.mxu0 0.0
        %660 = vmatprep.subr.mxu0 0.0
        %661 = vmatpush1.msra.mxu0 0.0
        %662 = vmatprep.mubr.f32.mxu0 0.0
        %663 = vmatmul.mubr.f32.gmra.mrb[0].mxu0 %v596
        %v664 = vpop.f32.mrb[0].mxu0
        %v665 = vadd.f32 0.0, %v664
        %v666 = vpop.f32.mrb[0].mxu0
        %667 = vdwg.mxu0
        %v668 = vrcp.pop %v594
        %v669 = vmul.f32 %v665, %v668
        %v670 = vld [vmem:[%s3 + $0x60] sm:$0xff]
        %v672 = vsel %vm509, %v669, 0
        %674 = vmatprep.subr.mxu0 0.0
        %675 = vmatpush1.msra.mxu0 %v670
        %676 = vmatprep.subr.mxu0 0.0
        %677 = vmatpush1.msra.mxu0 0.0
        %678 = vmatprep.subr.mxu0 0.0
        %679 = vmatpush1.msra.mxu0 0.0
        %680 = vmatprep.subr.mxu0 0.0
        %681 = vmatpush1.msra.mxu0 0.0
        %682 = vmatprep.subr.mxu0 0.0
        %683 = vmatpush1.msra.mxu0 0.0
        %684 = vmatprep.subr.mxu0 0.0
        %685 = vmatpush1.msra.mxu0 0.0
        %686 = vmatprep.subr.mxu0 0.0
        %687 = vmatpush1.msra.mxu0 0.0
        %688 = vmatprep.subr.mxu0 0.0
        %689 = vmatpush1.msra.mxu0 0.0
        %690 = vmatprep.subr.mxu0 0.0
        %691 = vmatpush1.msra.mxu0 0.0
        %692 = vmatprep.subr.mxu0 0.0
        %693 = vmatpush1.msra.mxu0 0.0
        %694 = vmatprep.subr.mxu0 0.0
        %695 = vmatpush1.msra.mxu0 0.0
        %696 = vmatprep.subr.mxu0 0.0
        %697 = vmatpush1.msra.mxu0 0.0
        %698 = vmatprep.subr.mxu0 0.0
        %699 = vmatpush1.msra.mxu0 0.0
        %700 = vmatprep.subr.mxu0 0.0
        %701 = vmatpush1.msra.mxu0 0.0
        %702 = vmatprep.subr.mxu0 0.0
        %703 = vmatpush1.msra.mxu0 0.0
        %704 = vmatprep.subr.mxu0 0.0
        %705 = vmatpush1.msra.mxu0 0.0
        %706 = vmatprep.subr.mxu0 0.0
        %707 = vmatpush1.msra.mxu0 0.0
        %708 = vmatprep.subr.mxu0 0.0
        %709 = vmatpush1.msra.mxu0 0.0
        %710 = vmatprep.subr.mxu0 0.0
        %711 = vmatpush1.msra.mxu0 0.0
        %712 = vmatprep.subr.mxu0 0.0
        %713 = vmatpush1.msra.mxu0 0.0
        %714 = vmatprep.subr.mxu0 0.0
        %715 = vmatpush1.msra.mxu0 0.0
        %716 = vmatprep.subr.mxu0 0.0
        %717 = vmatpush1.msra.mxu0 0.0
        %718 = vmatprep.subr.mxu0 0.0
        %719 = vmatpush1.msra.mxu0 0.0
        %720 = vmatprep.subr.mxu0 0.0
        %721 = vmatpush1.msra.mxu0 0.0
        %722 = vmatprep.subr.mxu0 0.0
        %723 = vmatpush1.msra.mxu0 0.0
        %724 = vmatprep.subr.mxu0 0.0
        %725 = vmatpush1.msra.mxu0 0.0
        %726 = vmatprep.subr.mxu0 0.0
        %727 = vmatpush1.msra.mxu0 0.0
        %728 = vmatprep.subr.mxu0 0.0
        %729 = vmatpush1.msra.mxu0 0.0
        %730 = vmatprep.subr.mxu0 0.0
        %731 = vmatpush1.msra.mxu0 0.0
        %732 = vmatprep.subr.mxu0 0.0
        %733 = vmatpush1.msra.mxu0 0.0
        %734 = vmatprep.subr.mxu0 0.0
        %735 = vmatpush1.msra.mxu0 0.0
        %736 = vmatprep.subr.mxu0 0.0
        %737 = vmatpush1.msra.mxu0 0.0
        %738 = vmatprep.mubr.f32.mxu0 0.0
        %739 = vmatmul.mubr.f32.gmra.mrb[0].mxu0 %v672
        %v740 = vpop.f32.mrb[0].mxu0
        %v741 = vadd.f32 0.0, %v740
        %v742 = vpop.f32.mrb[0].mxu0
        %743 = vdwg.mxu0
        %v744 = vadd.f32 %v508, %v741
        %745 = vrot.lane.b32.xlu0 %v345, 120
        %v746 = vpop.permute.xlu0 %745
        %747 = vrot.lane.b32.xlu0 %v423, 120
        %v748 = vpop.permute.xlu0 %747
        %v749 = vsel %vm509, %v746, 0
        %v751 = vsel %vm509, %v748, 0
        %753 = vmatprep.subr.mxu0 0.0
        %754 = vmatpush1.xpose.msra.mxu0 %v751
        %755 = vmatprep.subr.mxu0 0.0
        %756 = vmatpush1.xpose.msra.mxu0 0.0
        %757 = vmatprep.subr.mxu0 0.0
        %758 = vmatpush1.xpose.msra.mxu0 0.0
        %759 = vmatprep.subr.mxu0 0.0
        %760 = vmatpush1.xpose.msra.mxu0 0.0
        %761 = vmatprep.subr.mxu0 0.0
        %762 = vmatpush1.xpose.msra.mxu0 0.0
        %763 = vmatprep.subr.mxu0 0.0
        %764 = vmatpush1.xpose.msra.mxu0 0.0
        %765 = vmatprep.subr.mxu0 0.0
        %766 = vmatpush1.xpose.msra.mxu0 0.0
        %767 = vmatprep.subr.mxu0 0.0
        %768 = vmatpush1.xpose.msra.mxu0 0.0
        %769 = vmatprep.subr.mxu0 0.0
        %770 = vmatpush1.xpose.msra.mxu0 0.0
        %771 = vmatprep.subr.mxu0 0.0
        %772 = vmatpush1.xpose.msra.mxu0 0.0
        %773 = vmatprep.subr.mxu0 0.0
        %774 = vmatpush1.xpose.msra.mxu0 0.0
        %775 = vmatprep.subr.mxu0 0.0
        %776 = vmatpush1.xpose.msra.mxu0 0.0
        %777 = vmatprep.subr.mxu0 0.0
        %778 = vmatpush1.xpose.msra.mxu0 0.0
        %779 = vmatprep.subr.mxu0 0.0
        %780 = vmatpush1.xpose.msra.mxu0 0.0
        %781 = vmatprep.subr.mxu0 0.0
        %782 = vmatpush1.xpose.msra.mxu0 0.0
        %783 = vmatprep.subr.mxu0 0.0
        %784 = vmatpush1.xpose.msra.mxu0 0.0
        %785 = vmatprep.subr.mxu0 0.0
        %786 = vmatpush1.xpose.msra.mxu0 0.0
        %787 = vmatprep.subr.mxu0 0.0
        %788 = vmatpush1.xpose.msra.mxu0 0.0
        %789 = vmatprep.subr.mxu0 0.0
        %790 = vmatpush1.xpose.msra.mxu0 0.0
        %791 = vmatprep.subr.mxu0 0.0
        %792 = vmatpush1.xpose.msra.mxu0 0.0
        %793 = vmatprep.subr.mxu0 0.0
        %794 = vmatpush1.xpose.msra.mxu0 0.0
        %795 = vmatprep.subr.mxu0 0.0
        %796 = vmatpush1.xpose.msra.mxu0 0.0
        %797 = vmatprep.subr.mxu0 0.0
        %798 = vmatpush1.xpose.msra.mxu0 0.0
        %799 = vmatprep.subr.mxu0 0.0
        %800 = vmatpush1.xpose.msra.mxu0 0.0
        %801 = vmatprep.subr.mxu0 0.0
        %802 = vmatpush1.xpose.msra.mxu0 0.0
        %803 = vmatprep.subr.mxu0 0.0
        %804 = vmatpush1.xpose.msra.mxu0 0.0
        %805 = vmatprep.subr.mxu0 0.0
        %806 = vmatpush1.xpose.msra.mxu0 0.0
        %807 = vmatprep.subr.mxu0 0.0
        %808 = vmatpush1.xpose.msra.mxu0 0.0
        %809 = vmatprep.subr.mxu0 0.0
        %810 = vmatpush1.xpose.msra.mxu0 0.0
        %811 = vmatprep.subr.mxu0 0.0
        %812 = vmatpush1.xpose.msra.mxu0 0.0
        %813 = vmatprep.subr.mxu0 0.0
        %814 = vmatpush1.xpose.msra.mxu0 0.0
        %815 = vmatprep.subr.mxu0 0.0
        %816 = vmatpush1.xpose.msra.mxu0 0.0
        %817 = vmatprep.mubr.f32.mxu0 0.0
        %818 = vmatmul.mubr.f32.gmra.mrb[0].mxu0 %v749
        %v819 = vpop.f32.mrb[0].mxu0
        %v820 = vadd.f32 0.0, %v819
        %v821 = vpop.f32.mrb[0].mxu0
        %822 = vdwg.mxu0
        %v823 = vsel %vm509, %v820, -inf
        %824 = vmax.xlane.f32.xlu0 %v823
        %v825 = vpop.xlane.xlu0 %824
        %v826 = vsub.f32 %v820, %v825
        %v827 = vmul.f32 %v826, 1.442695
        %v828 = vpow.pop %v827
        %v829 = vsel %vm509, %v828, 0.0
        %830 = vadd.xlane.f32.xlu0 %v829
        %v831 = vpop.xlane.xlu0 %830
        %833 = vrot.lane.b32.xlu0 %v501, 120
        %v834 = vpop.permute.xlu0 %833
        %v837 = vsel %vm509, %v828, 0
        %839 = vmatprep.subr.mxu0 0.0
        %840 = vmatpush1.msra.mxu0 %v834
        %841 = vmatprep.subr.mxu0 0.0
        %842 = vmatpush1.msra.mxu0 0.0
        %843 = vmatprep.subr.mxu0 0.0
        %844 = vmatpush1.msra.mxu0 0.0
        %845 = vmatprep.subr.mxu0 0.0
        %846 = vmatpush1.msra.mxu0 0.0
        %847 = vmatprep.subr.mxu0 0.0
        %848 = vmatpush1.msra.mxu0 0.0
        %849 = vmatprep.subr.mxu0 0.0
        %850 = vmatpush1.msra.mxu0 0.0
        %851 = vmatprep.subr.mxu0 0.0
        %852 = vmatpush1.msra.mxu0 0.0
        %853 = vmatprep.subr.mxu0 0.0
        %854 = vmatpush1.msra.mxu0 0.0
        %855 = vmatprep.subr.mxu0 0.0
        %856 = vmatpush1.msra.mxu0 0.0
        %857 = vmatprep.subr.mxu0 0.0
        %858 = vmatpush1.msra.mxu0 0.0
        %859 = vmatprep.subr.mxu0 0.0
        %860 = vmatpush1.msra.mxu0 0.0
        %861 = vmatprep.subr.mxu0 0.0
        %862 = vmatpush1.msra.mxu0 0.0
        %863 = vmatprep.subr.mxu0 0.0
        %864 = vmatpush1.msra.mxu0 0.0
        %865 = vmatprep.subr.mxu0 0.0
        %866 = vmatpush1.msra.mxu0 0.0
        %867 = vmatprep.subr.mxu0 0.0
        %868 = vmatpush1.msra.mxu0 0.0
        %869 = vmatprep.subr.mxu0 0.0
        %870 = vmatpush1.msra.mxu0 0.0
        %871 = vmatprep.subr.mxu0 0.0
        %872 = vmatpush1.msra.mxu0 0.0
        %873 = vmatprep.subr.mxu0 0.0
        %874 = vmatpush1.msra.mxu0 0.0
        %875 = vmatprep.subr.mxu0 0.0
        %876 = vmatpush1.msra.mxu0 0.0
        %877 = vmatprep.subr.mxu0 0.0
        %878 = vmatpush1.msra.mxu0 0.0
        %879 = vmatprep.subr.mxu0 0.0
        %880 = vmatpush1.msra.mxu0 0.0
        %881 = vmatprep.subr.mxu0 0.0
        %882 = vmatpush1.msra.mxu0 0.0
        %883 = vmatprep.subr.mxu0 0.0
        %884 = vmatpush1.msra.mxu0 0.0
        %885 = vmatprep.subr.mxu0 0.0
        %886 = vmatpush1.msra.mxu0 0.0
        %887 = vmatprep.subr.mxu0 0.0
        %888 = vmatpush1.msra.mxu0 0.0
        %889 = vmatprep.subr.mxu0 0.0
        %890 = vmatpush1.msra.mxu0 0.0
        %891 = vmatprep.subr.mxu0 0.0
        %892 = vmatpush1.msra.mxu0 0.0
        %893 = vmatprep.subr.mxu0 0.0
        %894 = vmatpush1.msra.mxu0 0.0
        %895 = vmatprep.subr.mxu0 0.0
        %896 = vmatpush1.msra.mxu0 0.0
        %897 = vmatprep.subr.mxu0 0.0
        %898 = vmatpush1.msra.mxu0 0.0
        %899 = vmatprep.subr.mxu0 0.0
        %900 = vmatpush1.msra.mxu0 0.0
        %901 = vmatprep.subr.mxu0 0.0
        %902 = vmatpush1.msra.mxu0 0.0
        %903 = vmatprep.mubr.f32.mxu0 0.0
        %904 = vmatmul.mubr.f32.gmra.mrb[0].mxu0 %v837
        %v905 = vpop.f32.mrb[0].mxu0
        %v906 = vadd.f32 0.0, %v905
        %v907 = vpop.f32.mrb[0].mxu0
        %908 = vdwg.mxu0
        %v909 = vrcp.pop %v831
        %v910 = vmul.f32 %v906, %v909
        %v911 = vld [vmem:[%s3 + $0x68] sm:$0xff]
        %v913 = vsel %vm509, %v910, 0
        %915 = vmatprep.subr.mxu0 0.0
        %916 = vmatpush1.msra.mxu0 %v911
        %917 = vmatprep.subr.mxu0 0.0
        %918 = vmatpush1.msra.mxu0 0.0
        %919 = vmatprep.subr.mxu0 0.0
        %920 = vmatpush1.msra.mxu0 0.0
        %921 = vmatprep.subr.mxu0 0.0
        %922 = vmatpush1.msra.mxu0 0.0
        %923 = vmatprep.subr.mxu0 0.0
        %924 = vmatpush1.msra.mxu0 0.0
        %925 = vmatprep.subr.mxu0 0.0
        %926 = vmatpush1.msra.mxu0 0.0
        %927 = vmatprep.subr.mxu0 0.0
        %928 = vmatpush1.msra.mxu0 0.0
        %929 = vmatprep.subr.mxu0 0.0
        %930 = vmatpush1.msra.mxu0 0.0
        %931 = vmatprep.subr.mxu0 0.0
        %932 = vmatpush1.msra.mxu0 0.0
        %933 = vmatprep.subr.mxu0 0.0
        %934 = vmatpush1.msra.mxu0 0.0
        %935 = vmatprep.subr.mxu0 0.0
        %936 = vmatpush1.msra.mxu0 0.0
        %937 = vmatprep.subr.mxu0 0.0
        %938 = vmatpush1.msra.mxu0 0.0
        %939 = vmatprep.subr.mxu0 0.0
        %940 = vmatpush1.msra.mxu0 0.0
        %941 = vmatprep.subr.mxu0 0.0
        %942 = vmatpush1.msra.mxu0 0.0
        %943 = vmatprep.subr.mxu0 0.0
        %944 = vmatpush1.msra.mxu0 0.0
        %945 = vmatprep.subr.mxu0 0.0
        %946 = vmatpush1.msra.mxu0 0.0
        %947 = vmatprep.subr.mxu0 0.0
        %948 = vmatpush1.msra.mxu0 0.0
        %949 = vmatprep.subr.mxu0 0.0
        %950 = vmatpush1.msra.mxu0 0.0
        %951 = vmatprep.subr.mxu0 0.0
        %952 = vmatpush1.msra.mxu0 0.0
        %953 = vmatprep.subr.mxu0 0.0
        %954 = vmatpush1.msra.mxu0 0.0
        %955 = vmatprep.subr.mxu0 0.0
        %956 = vmatpush1.msra.mxu0 0.0
        %957 = vmatprep.subr.mxu0 0.0
        %958 = vmatpush1.msra.mxu0 0.0
        %959 = vmatprep.subr.mxu0 0.0
        %960 = vmatpush1.msra.mxu0 0.0
        %961 = vmatprep.subr.mxu0 0.0
        %962 = vmatpush1.msra.mxu0 0.0
        %963 = vmatprep.subr.mxu0 0.0
        %964 = vmatpush1.msra.mxu0 0.0
        %965 = vmatprep.subr.mxu0 0.0
        %966 = vmatpush1.msra.mxu0 0.0
        %967 = vmatprep.subr.mxu0 0.0
        %968 = vmatpush1.msra.mxu0 0.0
        %969 = vmatprep.subr.mxu0 0.0
        %970 = vmatpush1.msra.mxu0 0.0
        %971 = vmatprep.subr.mxu0 0.0
        %972 = vmatpush1.msra.mxu0 0.0
        %973 = vmatprep.subr.mxu0 0.0
        %974 = vmatpush1.msra.mxu0 0.0
        %975 = vmatprep.subr.mxu0 0.0
        %976 = vmatpush1.msra.mxu0 0.0
        %977 = vmatprep.subr.mxu0 0.0
        %978 = vmatpush1.msra.mxu0 0.0
        %979 = vmatprep.mubr.f32.mxu0 0.0
        %980 = vmatmul.mubr.f32.gmra.mrb[0].mxu0 %v913
        %v981 = vpop.f32.mrb[0].mxu0
        %v982 = vadd.f32 0.0, %v981
        %v983 = vpop.f32.mrb[0].mxu0
        %984 = vdwg.mxu0
        %v985 = vadd.f32 %v744, %v982
        %986 = vrot.lane.b32.xlu0 %v345, 112
        %v987 = vpop.permute.xlu0 %986
        %988 = vrot.lane.b32.xlu0 %v423, 112
        %v989 = vpop.permute.xlu0 %988
        %v990 = vsel %vm509, %v987, 0
        %v992 = vsel %vm509, %v989, 0
        %994 = vmatprep.subr.mxu0 0.0
        %995 = vmatpush1.xpose.msra.mxu0 %v992
        %996 = vmatprep.subr.mxu0 0.0
        %997 = vmatpush1.xpose.msra.mxu0 0.0
        %998 = vmatprep.subr.mxu0 0.0
        %999 = vmatpush1.xpose.msra.mxu0 0.0
        %1000 = vmatprep.subr.mxu0 0.0
        %1001 = vmatpush1.xpose.msra.mxu0 0.0
        %1002 = vmatprep.subr.mxu0 0.0
        %1003 = vmatpush1.xpose.msra.mxu0 0.0
        %1004 = vmatprep.subr.mxu0 0.0
        %1005 = vmatpush1.xpose.msra.mxu0 0.0
        %1006 = vmatprep.subr.mxu0 0.0
        %1007 = vmatpush1.xpose.msra.mxu0 0.0
        %1008 = vmatprep.subr.mxu0 0.0
        %1009 = vmatpush1.xpose.msra.mxu0 0.0
        %1010 = vmatprep.subr.mxu0 0.0
        %1011 = vmatpush1.xpose.msra.mxu0 0.0
        %1012 = vmatprep.subr.mxu0 0.0
        %1013 = vmatpush1.xpose.msra.mxu0 0.0
        %1014 = vmatprep.subr.mxu0 0.0
        %1015 = vmatpush1.xpose.msra.mxu0 0.0
        %1016 = vmatprep.subr.mxu0 0.0
        %1017 = vmatpush1.xpose.msra.mxu0 0.0
        %1018 = vmatprep.subr.mxu0 0.0
        %1019 = vmatpush1.xpose.msra.mxu0 0.0
        %1020 = vmatprep.subr.mxu0 0.0
        %1021 = vmatpush1.xpose.msra.mxu0 0.0
        %1022 = vmatprep.subr.mxu0 0.0
        %1023 = vmatpush1.xpose.msra.mxu0 0.0
        %1024 = vmatprep.subr.mxu0 0.0
        %1025 = vmatpush1.xpose.msra.mxu0 0.0
        %1026 = vmatprep.subr.mxu0 0.0
        %1027 = vmatpush1.xpose.msra.mxu0 0.0
        %1028 = vmatprep.subr.mxu0 0.0
        %1029 = vmatpush1.xpose.msra.mxu0 0.0
        %1030 = vmatprep.subr.mxu0 0.0
        %1031 = vmatpush1.xpose.msra.mxu0 0.0
        %1032 = vmatprep.subr.mxu0 0.0
        %1033 = vmatpush1.xpose.msra.mxu0 0.0
        %1034 = vmatprep.subr.mxu0 0.0
        %1035 = vmatpush1.xpose.msra.mxu0 0.0
        %1036 = vmatprep.subr.mxu0 0.0
        %1037 = vmatpush1.xpose.msra.mxu0 0.0
        %1038 = vmatprep.subr.mxu0 0.0
        %1039 = vmatpush1.xpose.msra.mxu0 0.0
        %1040 = vmatprep.subr.mxu0 0.0
        %1041 = vmatpush1.xpose.msra.mxu0 0.0
        %1042 = vmatprep.subr.mxu0 0.0
        %1043 = vmatpush1.xpose.msra.mxu0 0.0
        %1044 = vmatprep.subr.mxu0 0.0
        %1045 = vmatpush1.xpose.msra.mxu0 0.0
        %1046 = vmatprep.subr.mxu0 0.0
        %1047 = vmatpush1.xpose.msra.mxu0 0.0
        %1048 = vmatprep.subr.mxu0 0.0
        %1049 = vmatpush1.xpose.msra.mxu0 0.0
        %1050 = vmatprep.subr.mxu0 0.0
        %1051 = vmatpush1.xpose.msra.mxu0 0.0
        %1052 = vmatprep.subr.mxu0 0.0
        %1053 = vmatpush1.xpose.msra.mxu0 0.0
        %1054 = vmatprep.subr.mxu0 0.0
        %1055 = vmatpush1.xpose.msra.mxu0 0.0
        %1056 = vmatprep.subr.mxu0 0.0
        %1057 = vmatpush1.xpose.msra.mxu0 0.0
        %1058 = vmatprep.mubr.f32.mxu0 0.0
        %1059 = vmatmul.mubr.f32.gmra.mrb[0].mxu0 %v990
        %v1060 = vpop.f32.mrb[0].mxu0
        %v1061 = vadd.f32 0.0, %v1060
        %v1062 = vpop.f32.mrb[0].mxu0
        %1063 = vdwg.mxu0
        %v1064 = vsel %vm509, %v1061, -inf
        %1065 = vmax.xlane.f32.xlu0 %v1064
        %v1066 = vpop.xlane.xlu0 %1065
        %v1067 = vsub.f32 %v1061, %v1066
        %v1068 = vmul.f32 %v1067, 1.442695
        %v1069 = vpow.pop %v1068
        %v1070 = vsel %vm509, %v1069, 0.0
        %1071 = vadd.xlane.f32.xlu0 %v1070
        %v1072 = vpop.xlane.xlu0 %1071
        %1073 = vrot.lane.b32.xlu0 %v501, 112
        %v1074 = vpop.permute.xlu0 %1073
        %v1077 = vsel %vm509, %v1069, 0
        %1079 = vmatprep.subr.mxu0 0.0
        %1080 = vmatpush1.msra.mxu0 %v1074
        %1081 = vmatprep.subr.mxu0 0.0
        %1082 = vmatpush1.msra.mxu0 0.0
        %1083 = vmatprep.subr.mxu0 0.0
        %1084 = vmatpush1.msra.mxu0 0.0
        %1085 = vmatprep.subr.mxu0 0.0
        %1086 = vmatpush1.msra.mxu0 0.0
        %1087 = vmatprep.subr.mxu0 0.0
        %1088 = vmatpush1.msra.mxu0 0.0
        %1089 = vmatprep.subr.mxu0 0.0
        %1090 = vmatpush1.msra.mxu0 0.0
        %1091 = vmatprep.subr.mxu0 0.0
        %1092 = vmatpush1.msra.mxu0 0.0
        %1093 = vmatprep.subr.mxu0 0.0
        %1094 = vmatpush1.msra.mxu0 0.0
        %1095 = vmatprep.subr.mxu0 0.0
        %1096 = vmatpush1.msra.mxu0 0.0
        %1097 = vmatprep.subr.mxu0 0.0
        %1098 = vmatpush1.msra.mxu0 0.0
        %1099 = vmatprep.subr.mxu0 0.0
        %1100 = vmatpush1.msra.mxu0 0.0
        %1101 = vmatprep.subr.mxu0 0.0
        %1102 = vmatpush1.msra.mxu0 0.0
        %1103 = vmatprep.subr.mxu0 0.0
        %1104 = vmatpush1.msra.mxu0 0.0
        %1105 = vmatprep.subr.mxu0 0.0
        %1106 = vmatpush1.msra.mxu0 0.0
        %1107 = vmatprep.subr.mxu0 0.0
        %1108 = vmatpush1.msra.mxu0 0.0
        %1109 = vmatprep.subr.mxu0 0.0
        %1110 = vmatpush1.msra.mxu0 0.0
        %1111 = vmatprep.subr.mxu0 0.0
        %1112 = vmatpush1.msra.mxu0 0.0
        %1113 = vmatprep.subr.mxu0 0.0
        %1114 = vmatpush1.msra.mxu0 0.0
        %1115 = vmatprep.subr.mxu0 0.0
        %1116 = vmatpush1.msra.mxu0 0.0
        %1117 = vmatprep.subr.mxu0 0.0
        %1118 = vmatpush1.msra.mxu0 0.0
        %1119 = vmatprep.subr.mxu0 0.0
        %1120 = vmatpush1.msra.mxu0 0.0
        %1121 = vmatprep.subr.mxu0 0.0
        %1122 = vmatpush1.msra.mxu0 0.0
        %1123 = vmatprep.subr.mxu0 0.0
        %1124 = vmatpush1.msra.mxu0 0.0
        %1125 = vmatprep.subr.mxu0 0.0
        %1126 = vmatpush1.msra.mxu0 0.0
        %1127 = vmatprep.subr.mxu0 0.0
        %1128 = vmatpush1.msra.mxu0 0.0
        %1129 = vmatprep.subr.mxu0 0.0
        %1130 = vmatpush1.msra.mxu0 0.0
        %1131 = vmatprep.subr.mxu0 0.0
        %1132 = vmatpush1.msra.mxu0 0.0
        %1133 = vmatprep.subr.mxu0 0.0
        %1134 = vmatpush1.msra.mxu0 0.0
        %1135 = vmatprep.subr.mxu0 0.0
        %1136 = vmatpush1.msra.mxu0 0.0
        %1137 = vmatprep.subr.mxu0 0.0
        %1138 = vmatpush1.msra.mxu0 0.0
        %1139 = vmatprep.subr.mxu0 0.0
        %1140 = vmatpush1.msra.mxu0 0.0
        %1141 = vmatprep.subr.mxu0 0.0
        %1142 = vmatpush1.msra.mxu0 0.0
        %1143 = vmatprep.mubr.f32.mxu0 0.0
        %1144 = vmatmul.mubr.f32.gmra.mrb[0].mxu0 %v1077
        %v1145 = vpop.f32.mrb[0].mxu0
        %v1146 = vadd.f32 0.0, %v1145
        %v1147 = vpop.f32.mrb[0].mxu0
        %1148 = vdwg.mxu0
        %v1149 = vrcp.pop %v1072
        %v1150 = vmul.f32 %v1146, %v1149
        %v1151 = vld [vmem:[%s3 + $0x70] sm:$0xff]
        %v1153 = vsel %vm509, %v1150, 0
        %1155 = vmatprep.subr.mxu0 0.0
        %1156 = vmatpush1.msra.mxu0 %v1151
        %1157 = vmatprep.subr.mxu0 0.0
        %1158 = vmatpush1.msra.mxu0 0.0
        %1159 = vmatprep.subr.mxu0 0.0
        %1160 = vmatpush1.msra.mxu0 0.0
        %1161 = vmatprep.subr.mxu0 0.0
        %1162 = vmatpush1.msra.mxu0 0.0
        %1163 = vmatprep.subr.mxu0 0.0
        %1164 = vmatpush1.msra.mxu0 0.0
        %1165 = vmatprep.subr.mxu0 0.0
        %1166 = vmatpush1.msra.mxu0 0.0
        %1167 = vmatprep.subr.mxu0 0.0
        %1168 = vmatpush1.msra.mxu0 0.0
        %1169 = vmatprep.subr.mxu0 0.0
        %1170 = vmatpush1.msra.mxu0 0.0
        %1171 = vmatprep.subr.mxu0 0.0
        %1172 = vmatpush1.msra.mxu0 0.0
        %1173 = vmatprep.subr.mxu0 0.0
        %1174 = vmatpush1.msra.mxu0 0.0
        %1175 = vmatprep.subr.mxu0 0.0
        %1176 = vmatpush1.msra.mxu0 0.0
        %1177 = vmatprep.subr.mxu0 0.0
        %1178 = vmatpush1.msra.mxu0 0.0
        %1179 = vmatprep.subr.mxu0 0.0
        %1180 = vmatpush1.msra.mxu0 0.0
        %1181 = vmatprep.subr.mxu0 0.0
        %1182 = vmatpush1.msra.mxu0 0.0
        %1183 = vmatprep.subr.mxu0 0.0
        %1184 = vmatpush1.msra.mxu0 0.0
        %1185 = vmatprep.subr.mxu0 0.0
        %1186 = vmatpush1.msra.mxu0 0.0
        %1187 = vmatprep.subr.mxu0 0.0
        %1188 = vmatpush1.msra.mxu0 0.0
        %1189 = vmatprep.subr.mxu0 0.0
        %1190 = vmatpush1.msra.mxu0 0.0
        %1191 = vmatprep.subr.mxu0 0.0
        %1192 = vmatpush1.msra.mxu0 0.0
        %1193 = vmatprep.subr.mxu0 0.0
        %1194 = vmatpush1.msra.mxu0 0.0
        %1195 = vmatprep.subr.mxu0 0.0
        %1196 = vmatpush1.msra.mxu0 0.0
        %1197 = vmatprep.subr.mxu0 0.0
        %1198 = vmatpush1.msra.mxu0 0.0
        %1199 = vmatprep.subr.mxu0 0.0
        %1200 = vmatpush1.msra.mxu0 0.0
        %1201 = vmatprep.subr.mxu0 0.0
        %1202 = vmatpush1.msra.mxu0 0.0
        %1203 = vmatprep.subr.mxu0 0.0
        %1204 = vmatpush1.msra.mxu0 0.0
        %1205 = vmatprep.subr.mxu0 0.0
        %1206 = vmatpush1.msra.mxu0 0.0
        %1207 = vmatprep.subr.mxu0 0.0
        %1208 = vmatpush1.msra.mxu0 0.0
        %1209 = vmatprep.subr.mxu0 0.0
        %1210 = vmatpush1.msra.mxu0 0.0
        %1211 = vmatprep.subr.mxu0 0.0
        %1212 = vmatpush1.msra.mxu0 0.0
        %1213 = vmatprep.subr.mxu0 0.0
        %1214 = vmatpush1.msra.mxu0 0.0
        %1215 = vmatprep.subr.mxu0 0.0
        %1216 = vmatpush1.msra.mxu0 0.0
        %1217 = vmatprep.subr.mxu0 0.0
        %1218 = vmatpush1.msra.mxu0 0.0
        %1219 = vmatprep.mubr.f32.mxu0 0.0
        %1220 = vmatmul.mubr.f32.gmra.mrb[0].mxu0 %v1153
        %v1221 = vpop.f32.mrb[0].mxu0
        %v1222 = vadd.f32 0.0, %v1221
        %v1223 = vpop.f32.mrb[0].mxu0
        %1224 = vdwg.mxu0
        %v1225 = vadd.f32 %v985, %v1222
        %1226 = vrot.lane.b32.xlu0 %v345, 104
        %v1227 = vpop.permute.xlu0 %1226
        %1228 = vrot.lane.b32.xlu0 %v423, 104
        %v1229 = vpop.permute.xlu0 %1228
        %v1230 = vsel %vm509, %v1227, 0
        %v1232 = vsel %vm509, %v1229, 0
        %1234 = vmatprep.subr.mxu0 0.0
        %1235 = vmatpush1.xpose.msra.mxu0 %v1232
        %1236 = vmatprep.subr.mxu0 0.0
        %1237 = vmatpush1.xpose.msra.mxu0 0.0
        %1238 = vmatprep.subr.mxu0 0.0
        %1239 = vmatpush1.xpose.msra.mxu0 0.0
        %1240 = vmatprep.subr.mxu0 0.0
        %1241 = vmatpush1.xpose.msra.mxu0 0.0
        %1242 = vmatprep.subr.mxu0 0.0
        %1243 = vmatpush1.xpose.msra.mxu0 0.0
        %1244 = vmatprep.subr.mxu0 0.0
        %1245 = vmatpush1.xpose.msra.mxu0 0.0
        %1246 = vmatprep.subr.mxu0 0.0
        %1247 = vmatpush1.xpose.msra.mxu0 0.0
        %1248 = vmatprep.subr.mxu0 0.0
        %1249 = vmatpush1.xpose.msra.mxu0 0.0
        %1250 = vmatprep.subr.mxu0 0.0
        %1251 = vmatpush1.xpose.msra.mxu0 0.0
        %1252 = vmatprep.subr.mxu0 0.0
        %1253 = vmatpush1.xpose.msra.mxu0 0.0
        %1254 = vmatprep.subr.mxu0 0.0
        %1255 = vmatpush1.xpose.msra.mxu0 0.0
        %1256 = vmatprep.subr.mxu0 0.0
        %1257 = vmatpush1.xpose.msra.mxu0 0.0
        %1258 = vmatprep.subr.mxu0 0.0
        %1259 = vmatpush1.xpose.msra.mxu0 0.0
        %1260 = vmatprep.subr.mxu0 0.0
        %1261 = vmatpush1.xpose.msra.mxu0 0.0
        %1262 = vmatprep.subr.mxu0 0.0
        %1263 = vmatpush1.xpose.msra.mxu0 0.0
        %1264 = vmatprep.subr.mxu0 0.0
        %1265 = vmatpush1.xpose.msra.mxu0 0.0
        %1266 = vmatprep.subr.mxu0 0.0
        %1267 = vmatpush1.xpose.msra.mxu0 0.0
        %1268 = vmatprep.subr.mxu0 0.0
        %1269 = vmatpush1.xpose.msra.mxu0 0.0
        %1270 = vmatprep.subr.mxu0 0.0
        %1271 = vmatpush1.xpose.msra.mxu0 0.0
        %1272 = vmatprep.subr.mxu0 0.0
        %1273 = vmatpush1.xpose.msra.mxu0 0.0
        %1274 = vmatprep.subr.mxu0 0.0
        %1275 = vmatpush1.xpose.msra.mxu0 0.0
        %1276 = vmatprep.subr.mxu0 0.0
        %1277 = vmatpush1.xpose.msra.mxu0 0.0
        %1278 = vmatprep.subr.mxu0 0.0
        %1279 = vmatpush1.xpose.msra.mxu0 0.0
        %1280 = vmatprep.subr.mxu0 0.0
        %1281 = vmatpush1.xpose.msra.mxu0 0.0
        %1282 = vmatprep.subr.mxu0 0.0
        %1283 = vmatpush1.xpose.msra.mxu0 0.0
        %1284 = vmatprep.subr.mxu0 0.0
        %1285 = vmatpush1.xpose.msra.mxu0 0.0
        %1286 = vmatprep.subr.mxu0 0.0
        %1287 = vmatpush1.xpose.msra.mxu0 0.0
        %1288 = vmatprep.subr.mxu0 0.0
        %1289 = vmatpush1.xpose.msra.mxu0 0.0
        %1290 = vmatprep.subr.mxu0 0.0
        %1291 = vmatpush1.xpose.msra.mxu0 0.0
        %1292 = vmatprep.subr.mxu0 0.0
        %1293 = vmatpush1.xpose.msra.mxu0 0.0
        %1294 = vmatprep.subr.mxu0 0.0
        %1295 = vmatpush1.xpose.msra.mxu0 0.0
        %1296 = vmatprep.subr.mxu0 0.0
        %1297 = vmatpush1.xpose.msra.mxu0 0.0
        %1298 = vmatprep.mubr.f32.mxu0 0.0
        %1299 = vmatmul.mubr.f32.gmra.mrb[0].mxu0 %v1230
        %v1300 = vpop.f32.mrb[0].mxu0
        %v1301 = vadd.f32 0.0, %v1300
        %v1302 = vpop.f32.mrb[0].mxu0
        %1303 = vdwg.mxu0
        %v1304 = vsel %vm509, %v1301, -inf
        %1305 = vmax.xlane.f32.xlu0 %v1304
        %v1306 = vpop.xlane.xlu0 %1305
        %v1307 = vsub.f32 %v1301, %v1306
        %v1308 = vmul.f32 %v1307, 1.442695
        %v1309 = vpow.pop %v1308
        %v1310 = vsel %vm509, %v1309, 0.0
        %1311 = vadd.xlane.f32.xlu0 %v1310
        %v1312 = vpop.xlane.xlu0 %1311
        %1313 = vrot.lane.b32.xlu0 %v501, 104
        %v1314 = vpop.permute.xlu0 %1313
        %v1317 = vsel %vm509, %v1309, 0
        %1319 = vmatprep.subr.mxu0 0.0
        %1320 = vmatpush1.msra.mxu0 %v1314
        %1321 = vmatprep.subr.mxu0 0.0
        %1322 = vmatpush1.msra.mxu0 0.0
        %1323 = vmatprep.subr.mxu0 0.0
        %1324 = vmatpush1.msra.mxu0 0.0
        %1325 = vmatprep.subr.mxu0 0.0
        %1326 = vmatpush1.msra.mxu0 0.0
        %1327 = vmatprep.subr.mxu0 0.0
        %1328 = vmatpush1.msra.mxu0 0.0
        %1329 = vmatprep.subr.mxu0 0.0
        %1330 = vmatpush1.msra.mxu0 0.0
        %1331 = vmatprep.subr.mxu0 0.0
        %1332 = vmatpush1.msra.mxu0 0.0
        %1333 = vmatprep.subr.mxu0 0.0
        %1334 = vmatpush1.msra.mxu0 0.0
        %1335 = vmatprep.subr.mxu0 0.0
        %1336 = vmatpush1.msra.mxu0 0.0
        %1337 = vmatprep.subr.mxu0 0.0
        %1338 = vmatpush1.msra.mxu0 0.0
        %1339 = vmatprep.subr.mxu0 0.0
        %1340 = vmatpush1.msra.mxu0 0.0
        %1341 = vmatprep.subr.mxu0 0.0
        %1342 = vmatpush1.msra.mxu0 0.0
        %1343 = vmatprep.subr.mxu0 0.0
        %1344 = vmatpush1.msra.mxu0 0.0
        %1345 = vmatprep.subr.mxu0 0.0
        %1346 = vmatpush1.msra.mxu0 0.0
        %1347 = vmatprep.subr.mxu0 0.0
        %1348 = vmatpush1.msra.mxu0 0.0
        %1349 = vmatprep.subr.mxu0 0.0
        %1350 = vmatpush1.msra.mxu0 0.0
        %1351 = vmatprep.subr.mxu0 0.0
        %1352 = vmatpush1.msra.mxu0 0.0
        %1353 = vmatprep.subr.mxu0 0.0
        %1354 = vmatpush1.msra.mxu0 0.0
        %1355 = vmatprep.subr.mxu0 0.0
        %1356 = vmatpush1.msra.mxu0 0.0
        %1357 = vmatprep.subr.mxu0 0.0
        %1358 = vmatpush1.msra.mxu0 0.0
        %1359 = vmatprep.subr.mxu0 0.0
        %1360 = vmatpush1.msra.mxu0 0.0
        %1361 = vmatprep.subr.mxu0 0.0
        %1362 = vmatpush1.msra.mxu0 0.0
        %1363 = vmatprep.subr.mxu0 0.0
        %1364 = vmatpush1.msra.mxu0 0.0
        %1365 = vmatprep.subr.mxu0 0.0
        %1366 = vmatpush1.msra.mxu0 0.0
        %1367 = vmatprep.subr.mxu0 0.0
        %1368 = vmatpush1.msra.mxu0 0.0
        %1369 = vmatprep.subr.mxu0 0.0
        %1370 = vmatpush1.msra.mxu0 0.0
        %1371 = vmatprep.subr.mxu0 0.0
        %1372 = vmatpush1.msra.mxu0 0.0
        %1373 = vmatprep.subr.mxu0 0.0
        %1374 = vmatpush1.msra.mxu0 0.0
        %1375 = vmatprep.subr.mxu0 0.0
        %1376 = vmatpush1.msra.mxu0 0.0
        %1377 = vmatprep.subr.mxu0 0.0
        %1378 = vmatpush1.msra.mxu0 0.0
        %1379 = vmatprep.subr.mxu0 0.0
        %1380 = vmatpush1.msra.mxu0 0.0
        %1381 = vmatprep.subr.mxu0 0.0
        %1382 = vmatpush1.msra.mxu0 0.0
        %1383 = vmatprep.mubr.f32.mxu0 0.0
        %1384 = vmatmul.mubr.f32.gmra.mrb[0].mxu0 %v1317
        %v1385 = vpop.f32.mrb[0].mxu0
        %v1386 = vadd.f32 0.0, %v1385
        %v1387 = vpop.f32.mrb[0].mxu0
        %1388 = vdwg.mxu0
        %v1389 = vrcp.pop %v1312
        %v1390 = vmul.f32 %v1386, %v1389
        %v1391 = vld [vmem:[%s3 + $0x78] sm:$0xff]
        %v1393 = vsel %vm509, %v1390, 0
        %1395 = vmatprep.subr.mxu0 0.0
        %1396 = vmatpush1.msra.mxu0 %v1391
        %1397 = vmatprep.subr.mxu0 0.0
        %1398 = vmatpush1.msra.mxu0 0.0
        %1399 = vmatprep.subr.mxu0 0.0
        %1400 = vmatpush1.msra.mxu0 0.0
        %1401 = vmatprep.subr.mxu0 0.0
        %1402 = vmatpush1.msra.mxu0 0.0
        %1403 = vmatprep.subr.mxu0 0.0
        %1404 = vmatpush1.msra.mxu0 0.0
        %1405 = vmatprep.subr.mxu0 0.0
        %1406 = vmatpush1.msra.mxu0 0.0
        %1407 = vmatprep.subr.mxu0 0.0
        %1408 = vmatpush1.msra.mxu0 0.0
        %1409 = vmatprep.subr.mxu0 0.0
        %1410 = vmatpush1.msra.mxu0 0.0
        %1411 = vmatprep.subr.mxu0 0.0
        %1412 = vmatpush1.msra.mxu0 0.0
        %1413 = vmatprep.subr.mxu0 0.0
        %1414 = vmatpush1.msra.mxu0 0.0
        %1415 = vmatprep.subr.mxu0 0.0
        %1416 = vmatpush1.msra.mxu0 0.0
        %1417 = vmatprep.subr.mxu0 0.0
        %1418 = vmatpush1.msra.mxu0 0.0
        %1419 = vmatprep.subr.mxu0 0.0
        %1420 = vmatpush1.msra.mxu0 0.0
        %1421 = vmatprep.subr.mxu0 0.0
        %1422 = vmatpush1.msra.mxu0 0.0
        %1423 = vmatprep.subr.mxu0 0.0
        %1424 = vmatpush1.msra.mxu0 0.0
        %1425 = vmatprep.subr.mxu0 0.0
        %1426 = vmatpush1.msra.mxu0 0.0
        %1427 = vmatprep.subr.mxu0 0.0
        %1428 = vmatpush1.msra.mxu0 0.0
        %1429 = vmatprep.subr.mxu0 0.0
        %1430 = vmatpush1.msra.mxu0 0.0
        %1431 = vmatprep.subr.mxu0 0.0
        %1432 = vmatpush1.msra.mxu0 0.0
        %1433 = vmatprep.subr.mxu0 0.0
        %1434 = vmatpush1.msra.mxu0 0.0
        %1435 = vmatprep.subr.mxu0 0.0
        %1436 = vmatpush1.msra.mxu0 0.0
        %1437 = vmatprep.subr.mxu0 0.0
        %1438 = vmatpush1.msra.mxu0 0.0
        %1439 = vmatprep.subr.mxu0 0.0
        %1440 = vmatpush1.msra.mxu0 0.0
        %1441 = vmatprep.subr.mxu0 0.0
        %1442 = vmatpush1.msra.mxu0 0.0
        %1443 = vmatprep.subr.mxu0 0.0
        %1444 = vmatpush1.msra.mxu0 0.0
        %1445 = vmatprep.subr.mxu0 0.0
        %1446 = vmatpush1.msra.mxu0 0.0
        %1447 = vmatprep.subr.mxu0 0.0
        %1448 = vmatpush1.msra.mxu0 0.0
        %1449 = vmatprep.subr.mxu0 0.0
        %1450 = vmatpush1.msra.mxu0 0.0
        %1451 = vmatprep.subr.mxu0 0.0
        %1452 = vmatpush1.msra.mxu0 0.0
        %1453 = vmatprep.subr.mxu0 0.0
        %1454 = vmatpush1.msra.mxu0 0.0
        %1455 = vmatprep.subr.mxu0 0.0
        %1456 = vmatpush1.msra.mxu0 0.0
        %1457 = vmatprep.subr.mxu0 0.0
        %1458 = vmatpush1.msra.mxu0 0.0
        %1459 = vmatprep.mubr.f32.mxu0 0.0
        %1460 = vmatmul.mubr.f32.gmra.mrb[0].mxu0 %v1393
        %v1461 = vpop.f32.mrb[0].mxu0
        %v1462 = vadd.f32 0.0, %v1461
        %v1463 = vpop.f32.mrb[0].mxu0
        %1464 = vdwg.mxu0
        %v1465 = vadd.f32 %v1225, %v1462
        %1466 = vst.msk [vmem:[%s241] sm:$0xff] %vm274, %v1465
        %s1467 = sand.u32 %s147, 1
        %s1468 = scalar_lea.sflag [#allocation3], %s1467
        %s1469 = sand.u32 %s147, 1
        %s1470 = smul.addr %s1469, 8
        %s1471 = scalar_lea.vmem [#allocation2], %s1470
        // Predicated region
        $region41: #{tpu_custom_call.1} parent=39 // pred_check
          %p1472 = pneg %p157
        $region42: #{tpu_custom_call.1} parent=39 // pred_check_branch
          %1474 = sbr.rel (%p1472) target = $region44
        $region43: #{tpu_custom_call.1} parent=39 // pred_region
          %s1476 = ssub.s32 128, 128
          %1477 = vsyncadd %s1468, %s1476
          %s1478 = smul.addr %s19, 128
          %s1479 = scalar_lea.hbm %s5, %s1478
          %s1481 = sshll.u32 %s1471, 4
          %s1482 = int_to_ptr.vmem [resolvable:$true] %s1481
          %1484 = dma.vmem_to_hbm [thread:$0]  %s1482, 128, %s1479, %s1468
        $region44: #{tpu_custom_call.1} parent=39 // pred_fallthru
          _
      $region40: #{tpu_custom_call.1} parent=5 // pred_fallthru
        _
      %p1485 = scmp.le.s32.totalorder 2, %s14
      // Predicated region
      $region45: #{tpu_custom_call.1} parent=5 // pred_check
        %p1486 = pneg %p1485
      $region46: #{tpu_custom_call.1} parent=5 // pred_check_branch
        %1488 = sbr.rel (%p1486) target = $region48
      $region47: #{tpu_custom_call.1} parent=5 // pred_region
        %s1489 = ssub.s32 %s14, 2
        // Predicated region
        $region49: #{tpu_custom_call.1} parent=47 // pred_check
          %p1490 = pneg %p163
        $region50: #{tpu_custom_call.1} parent=47 // pred_check_branch
          %1492 = sbr.rel (%p1490) target = $region52
        $region51: #{tpu_custom_call.1} parent=47 // pred_region
          %s1493 = sand.u32 %s148, 1
          %s1494 = scalar_lea.sflag [#allocation3], %s1493
          %s1495 = sand.u32 %s148, 1
          %s1496 = smul.addr %s1495, 8
          %s1497 = scalar_lea.vmem [#allocation2], %s1496
          %1498 = dma.done %s1494, 128
        $region52: #{tpu_custom_call.1} parent=47 // pred_fallthru
          _
      $region48: #{tpu_custom_call.1} parent=5 // pred_fallthru
        _
    $region6: #{tpu_custom_call.1} parent=1 // loop_footer
      %s18 = sadd.s32 1, %s14
    $region7: #{tpu_custom_call.1} parent=1 // loop_footer_branch
      %13 = sbr.rel target = $region3
    $region8: #{tpu_custom_call.1} parent=1 // loop_exit
      _
    %1499 = vsyncpa [#allocation3], 1
    %s1500 = scalar_lea.sflag [#allocation3], 1
    %1501 = vsyncpa %s1500, 1

</llo_original>
